<compile_context>
chip_gen: v7x
topology: tpu7x:2x2x1
jax: 0.10.0
libtpu: 0.0.40
codegen_flags: <defaults>
</compile_context>

<pallas_src>
import math
import functools

import jax
import jax.numpy as jnp
from jax.experimental import pallas as pl
from jax.experimental.pallas import tpu as pltpu


# ------------------------------------------------------------------ kernel ---

def _cross_attn_kernel(q_ref, k_ref, v_ref,
                       wq_ref, wk_ref, wv_ref, wfc_ref,
                       g_ref, b_ref,
                       o_ref,
                       kp_sc, vp_sc,
                       *, nhead, d_k, d_v, d_model, eps, approx_recip):
    """One (batch, q-tile) step of the fused cross-attention layer."""
    j = pl.program_id(1)   # q-tile index within the current batch

    # ---- K/V projections: computed once per batch, cached head-major --------
    # CORRECTNESS NOTE: this cache is only valid because the q-tile axis is the
    # innermost, sequentially executed ("arbitrary") grid axis with batch
    # outermost; j > 0 tiles read scratch written at j == 0.  Do NOT mark the
    # q axis "parallel" or reorder the grid without removing this cache.
    @pl.when(j == 0)
    def _():
        kp = jnp.dot(k_ref[...], wk_ref[...],
                     preferred_element_type=jnp.float32)      # (Lk, H*d_k) f32
        vp = jnp.dot(v_ref[...], wv_ref[...],
                     preferred_element_type=jnp.float32)      # (Lk, H*d_v) f32
        for h in range(nhead):
            kp_sc[h] = kp[:, h * d_k:(h + 1) * d_k].astype(jnp.bfloat16)
            vp_sc[h] = vp[:, h * d_v:(h + 1) * d_v].astype(jnp.bfloat16)

    q_res = q_ref[...]                                        # (tq, Dp) f32 residual
    # 1/sqrt(d_k) scale is pre-folded into wq by the wrapper.
    qp = jnp.dot(q_res.astype(jnp.bfloat16), wq_ref[...],
                 preferred_element_type=jnp.float32)          # (tq, H*d_k) f32

    # ---- per-head attention, accumulated straight into fc output + residual -
    acc = q_res                                               # (tq, Dp) f32
    for h in range(nhead):
        qh = qp[:, h * d_k:(h + 1) * d_k].astype(jnp.bfloat16)   # (tq, d_k)
        kh = kp_sc[h]                                             # (Lk, d_k) bf16
        vh = vp_sc[h]                                             # (Lk, d_v) bf16
        s = jax.lax.dot_general(qh, kh, (((1,), (1,)), ((), ())),
                                preferred_element_type=jnp.float32)  # (tq, Lk)
        s = s - jnp.max(s, axis=-1, keepdims=True)
        p = jnp.exp(s)
        denom = jnp.sum(p, axis=-1, keepdims=True)                # (tq, 1) f32
        pv = jnp.dot(p.astype(jnp.bfloat16), vh,
                     preferred_element_type=jnp.float32)          # (tq, d_v) f32
        # Deferred softmax normalization: rescale the PV result, not p.
        if approx_recip:
            pv = pv * pl.reciprocal(denom, approx=True)
        else:
            pv = pv / denom
        acc = acc + jnp.dot(pv.astype(jnp.bfloat16), wfc_ref[h],
                            preferred_element_type=jnp.float32)   # (tq, Dp)

    # ---- LayerNorm over the true d_model features ---------------------------
    # Padded lanes of acc are exactly 0, so plain sums and the E[x^2] - mu^2
    # variance form give the exact statistics of the first d_model lanes.
    inv_d = 1.0 / float(d_model)
    mu = jnp.sum(acc, axis=-1, keepdims=True) * inv_d
    var = jnp.sum(acc * acc, axis=-1, keepdims=True) * inv_d - mu * mu
    o_ref[...] = (acc - mu) * jax.lax.rsqrt(var + eps) * g_ref[...] + b_ref[...]


# ----------------------------------------------------------------- wrapper ---

def _round_up(x, m):
    return (x + m - 1) // m * m


def _choose_q_tile(Lq, target):
    if Lq <= target:
        return Lq
    for t in (512, 256, 128, 64, 32, 16, 8):
        if t <= target and Lq % t == 0:
            return t
    return Lq


def cross_attn_forward(q, k, v, params, *, nhead, d_k, d_v, eps=1e-6,
                       q_block=None, approx_recip=True):
    """q: (B, Lq, d_model), k/v: (B, Lk, d_model) -> (B, Lq, d_model)."""
    B, Lq, d_model = q.shape
    Lk = k.shape[1]
    assert v.shape[1] == Lk and k.shape[2] == d_model and v.shape[2] == d_model

    # Lane-dense feature dim (biggest store-side lever when d_model < 128).
    Dp = _round_up(d_model, 128)
    pad = Dp - d_model

    # Fold attention scale into w_q (free); matmul weights in bf16; fc head-major.
    wq = (params["w_qs"] * (1.0 / math.sqrt(d_k))).astype(jnp.bfloat16)
    wk = params["w_ks"].astype(jnp.bfloat16)
    wv = params["w_vs"].astype(jnp.bfloat16)
    wfc = params["fc"].reshape(nhead, d_v, d_model).astype(jnp.bfloat16)
    gamma = params["ln_g"].astype(jnp.float32).reshape(1, d_model)
    beta = params["ln_b"].astype(jnp.float32).reshape(1, d_model)

    if pad:
        q = jnp.pad(q, ((0, 0), (0, 0), (0, pad)))
        k = jnp.pad(k, ((0, 0), (0, 0), (0, pad)))
        v = jnp.pad(v, ((0, 0), (0, 0), (0, pad)))
        wq = jnp.pad(wq, ((0, pad), (0, 0)))
        wk = jnp.pad(wk, ((0, pad), (0, 0)))
        wv = jnp.pad(wv, ((0, pad), (0, 0)))
        wfc = jnp.pad(wfc, ((0, 0), (0, 0), (0, pad)))
        gamma = jnp.pad(gamma, ((0, 0), (0, pad)))
        beta = jnp.pad(beta, ((0, 0), (0, pad)))

    # k/v are only ever consumed as bf16 MXU operands: cast once in the wrapper
    # (halves their HBM DMA bytes and VMEM blocks). q stays f32 (residual / LN).
    q = q.astype(jnp.float32)
    k = k.astype(jnp.bfloat16)
    v = v.astype(jnp.bfloat16)

    if q_block is not None:
        tq = q_block
    else:
        try:
            kind = jax.devices()[0].device_kind.lower()
        except Exception:  # pragma: no cover
            kind = ""
        # v5e MXU is 128-wide -> tq=128 already fills M; 256 elsewhere.
        tq = _choose_q_tile(Lq, 128 if "v5" in kind else 256)
    assert Lq % tq == 0 and (tq == Lq or tq % 8 == 0)
    n_q = Lq // tq

    hk, hv = nhead * d_k, nhead * d_v

    # Advisory cost estimate for XLA's scheduler around the custom call.
    flops = 2 * B * (Lq * Dp * hk                      # Q projection
                     + Lk * Dp * (hk + hv)             # K/V projections
                     + nhead * Lq * Lk * (d_k + d_v)   # QK^T + PV
                     + Lq * hv * Dp)                   # fc projection
    transcendentals = B * nhead * Lq * Lk
    bytes_accessed = (4 * B * Lq * Dp                  # q in (f32)
                      + 2 * 2 * B * Lk * Dp            # k, v in (bf16)
                      + 2 * (Dp * hk * 2 + Dp * hv + hv * Dp)  # weights (bf16)
                      + 2 * 4 * Dp                     # gamma, beta
                      + 4 * B * Lq * Dp)               # out (f32)
    cost = pl.CostEstimate(flops=int(flops),
                           transcendentals=int(transcendentals),
                           bytes_accessed=int(bytes_accessed))

    # Rough scoped-VMEM budget (double-buffered blocks + scratches), with margin.
    def _lp(x):  # lane-pad
        return _round_up(max(int(x), 1), 128)
    vmem_est = (2 * tq * Dp * 4                        # q blocks
                + 2 * Lk * Dp * 2 * 2                  # k, v blocks (bf16)
                + 2 * Dp * _lp(hk) * 2 * 2             # wq, wk
                + 2 * Dp * _lp(hv) * 2                 # wv
                + 2 * nhead * _round_up(d_v, 8) * Dp * 2   # wfc
                + 2 * 2 * 8 * Dp * 4                   # gamma, beta
                + 2 * tq * Dp * 4                      # out blocks
                + nhead * Lk * _lp(d_k) * 2            # kp scratch
                + nhead * Lk * _lp(d_v) * 2)           # vp scratch
    vmem_limit = int(min(96 * 2**20, max(32 * 2**20, 2 * vmem_est)))

    kern = functools.partial(_cross_attn_kernel,
                             nhead=nhead, d_k=d_k, d_v=d_v, d_model=d_model,
                             eps=eps, approx_recip=approx_recip)

    out = pl.pallas_call(
        kern,
        out_shape=jax.ShapeDtypeStruct((B, Lq, Dp), jnp.float32),
        grid=(B, n_q),
        in_specs=[
            pl.BlockSpec((pl.Squeezed(), tq, Dp), lambda b, j: (b, j, 0)),   # q
            pl.BlockSpec((pl.Squeezed(), Lk, Dp), lambda b, j: (b, 0, 0)),   # k
            pl.BlockSpec((pl.Squeezed(), Lk, Dp), lambda b, j: (b, 0, 0)),   # v
            pl.BlockSpec((Dp, hk), lambda b, j: (0, 0)),                     # wq
            pl.BlockSpec((Dp, hk), lambda b, j: (0, 0)),                     # wk
            pl.BlockSpec((Dp, hv), lambda b, j: (0, 0)),                     # wv
            pl.BlockSpec((nhead, d_v, Dp), lambda b, j: (0, 0, 0)),          # wfc
            pl.BlockSpec((1, Dp), lambda b, j: (0, 0)),                      # gamma
            pl.BlockSpec((1, Dp), lambda b, j: (0, 0)),                      # beta
        ],
        out_specs=pl.BlockSpec((pl.Squeezed(), tq, Dp),
                               lambda b, j: (b, j, 0)),
        scratch_shapes=[
            pltpu.VMEM((nhead, Lk, d_k), jnp.bfloat16),   # head-major K proj
            pltpu.VMEM((nhead, Lk, d_v), jnp.bfloat16),   # head-major V proj
        ],
        compiler_params=pltpu.CompilerParams(
            dimension_semantics=("parallel", "arbitrary"),
            vmem_limit_bytes=vmem_limit),
        cost_estimate=cost,
    )(q, k, v, wq, wk, wv, wfc, gamma, beta)

    return out[:, :, :d_model] if pad else out


# ------------------------------------------------------- params & reference ---

def init_params(key, d_model, nhead, d_k, d_v):
    ks = jax.random.split(key, 4)

    def dense(kk, fi, fo):
        return jax.random.normal(kk, (fi, fo), jnp.float32) / jnp.sqrt(float(fi))

    return {
        "w_qs": dense(ks[0], d_model, nhead * d_k),   # nn.Linear, bias=False
        "w_ks": dense(ks[1], d_model, nhead * d_k),
        "w_vs": dense(ks[2], d_model, nhead * d_v),
        "fc":   dense(ks[3], nhead * d_v, d_model),
        "ln_g": jnp.ones((d_model,), jnp.float32),
        "ln_b": jnp.zeros((d_model,), jnp.float32),
    }


def cross_attn_reference(q, k, v, params, *, nhead, d_k, d_v, eps=1e-6):
    """Pure-JAX f32 reference mirroring the PyTorch forward (mask=None)."""
    B, Lq, D = q.shape
    Lk = k.shape[1]
    qp = (q @ params["w_qs"]).reshape(B, Lq, nhead, d_k).transpose(0, 2, 1, 3)
    kp = (k @ params["w_ks"]).reshape(B, Lk, nhead, d_k).transpose(0, 2, 1, 3)
    vp = (v @ params["w_vs"]).reshape(B, Lk, nhead, d_v).transpose(0, 2, 1, 3)
    s = jnp.einsum("bhqd,bhkd->bhqk", qp / math.sqrt(d_k), kp)
    p = jax.nn.softmax(s, axis=-1)
    o = jnp.einsum("bhqk,bhkd->bhqd", p, vp)
    o = o.transpose(0, 2, 1, 3).reshape(B, Lq, nhead * d_v)
    y = o @ params["fc"] + q
    mu = jnp.mean(y, axis=-1, keepdims=True)
    var = jnp.mean(jnp.square(y - mu), axis=-1, keepdims=True)
    return (y - mu) * jax.lax.rsqrt(var + eps) * params["ln_g"] + params["ln_b"]


# -------------------------------------------------------------------- main ---

if __name__ == "__main__":
    key = jax.random.PRNGKey(0)
    k_q, k_k, k_v, k_param = jax.random.split(key, 4)

    B, Lq, Lk = 2, 16, 16
    d_model, nhead = 32, 4
    d_k = d_v = d_model // nhead   # module is used with d_k == d_v == d_model/nhead

    q = jax.random.normal(k_q, (B, Lq, d_model), jnp.float32)
    k = jax.random.normal(k_k, (B, Lk, d_model), jnp.float32)
    v = jax.random.normal(k_v, (B, Lk, d_model), jnp.float32)
    params = init_params(k_param, d_model, nhead, d_k, d_v)

    # q_block=8 forces two q-tiles per batch so the cached-K/V (j > 0) path runs;
    # d_model=32 also exercises the lane-dense (pad-to-128) path.
    out = cross_attn_forward(q, k, v, params,
                             nhead=nhead, d_k=d_k, d_v=d_v, q_block=8)
    out = jax.block_until_ready(out)

    assert out.shape == (B, Lq, d_model), out.shape
    assert bool(jnp.all(jnp.isfinite(out)))

    ref = cross_attn_reference(q, k, v, params, nhead=nhead, d_k=d_k, d_v=d_v)
    max_err = float(jnp.max(jnp.abs(out - ref)))
    assert max_err < 0.2, f"max abs err vs f32 reference too large: {max_err}"

    print("KERNEL_OK")
</pallas_src>

<mosaic_0001>
module attributes {stable_mosaic.version = 11 : i64} {
  func.func @_cross_attn_kernel(%arg0: i32, %arg1: i32, %arg2: memref<1x8x128xf32, #tpu.memory_space<vmem>>, %arg3: memref<1x16x128xbf16, #tpu.memory_space<vmem>>, %arg4: memref<1x16x128xbf16, #tpu.memory_space<vmem>>, %arg5: memref<128x32xbf16, #tpu.memory_space<vmem>>, %arg6: memref<128x32xbf16, #tpu.memory_space<vmem>>, %arg7: memref<128x32xbf16, #tpu.memory_space<vmem>>, %arg8: memref<4x8x128xbf16, #tpu.memory_space<vmem>>, %arg9: memref<1x128xf32, #tpu.memory_space<vmem>>, %arg10: memref<1x128xf32, #tpu.memory_space<vmem>>, %arg11: memref<1x8x128xf32, #tpu.memory_space<vmem>>, %arg12: memref<4x16x8xbf16, #tpu.memory_space<vmem>>, %arg13: memref<4x16x8xbf16, #tpu.memory_space<vmem>>) attributes {dimension_semantics = [#tpu.dimension_semantics<parallel>, #tpu.dimension_semantics<arbitrary>], iteration_bounds = array<i64: 2, 2>, scalar_prefetch = 0 : i64, scratch_operands = 2 : i64, tpu.core_type = #tpu.core_type<tc>, window_params = [{transform_indices = @transform_0, window_bounds = array<i64: 1, 8, 128>}, {transform_indices = @transform_1, window_bounds = array<i64: 1, 16, 128>}, {transform_indices = @transform_2, window_bounds = array<i64: 1, 16, 128>}, {pipeline_mode = #tpu.pipeline_mode<synchronous>, transform_indices = @transform_3, window_bounds = array<i64: 128, 32>}, {pipeline_mode = #tpu.pipeline_mode<synchronous>, transform_indices = @transform_4, window_bounds = array<i64: 128, 32>}, {pipeline_mode = #tpu.pipeline_mode<synchronous>, transform_indices = @transform_5, window_bounds = array<i64: 128, 32>}, {pipeline_mode = #tpu.pipeline_mode<synchronous>, transform_indices = @transform_6, window_bounds = array<i64: 4, 8, 128>}, {pipeline_mode = #tpu.pipeline_mode<synchronous>, transform_indices = @transform_7, window_bounds = array<i64: 1, 128>}, {pipeline_mode = #tpu.pipeline_mode<synchronous>, transform_indices = @transform_8, window_bounds = array<i64: 1, 128>}, {transform_indices = @transform_9, window_bounds = array<i64: 1, 8, 128>}]} {
    %c0_i32 = arith.constant 0 : i32
    %0 = arith.cmpi eq, %arg1, %c0_i32 : i32
    %1 = arith.extui %0 : i1 to i32
    %c0_i32_0 = arith.constant 0 : i32
    %2 = arith.cmpi ne, %1, %c0_i32_0 : i32
    scf.if %2 {
      %c0_70 = arith.constant 0 : index
      %c0_71 = arith.constant 0 : index
      %c0_72 = arith.constant 0 : index
      %131 = vector.load %arg3[%c0_70, %c0_71, %c0_72] : memref<1x16x128xbf16, #tpu.memory_space<vmem>>, vector<1x16x128xbf16>
      %132 = vector.shape_cast %131 : vector<1x16x128xbf16> to vector<16x128xbf16>
      %c0_73 = arith.constant 0 : index
      %c0_74 = arith.constant 0 : index
      %133 = vector.load %arg6[%c0_73, %c0_74] : memref<128x32xbf16, #tpu.memory_space<vmem>>, vector<128x32xbf16>
      %cst_75 = arith.constant dense<0.000000e+00> : vector<16x32xf32>
      %134 = tpu.matmul %132, %133, %cst_75 {dimension_numbers = #tpu.dot_dimension_numbers<[1], [0], [0], [1], [0, 0, 1, 1], [], []>} : vector<16x128xbf16>, vector<128x32xbf16>, vector<16x32xf32> -> vector<16x32xf32>
      %c0_76 = arith.constant 0 : index
      %c0_77 = arith.constant 0 : index
      %c0_78 = arith.constant 0 : index
      %135 = vector.load %arg4[%c0_76, %c0_77, %c0_78] : memref<1x16x128xbf16, #tpu.memory_space<vmem>>, vector<1x16x128xbf16>
      %136 = vector.shape_cast %135 : vector<1x16x128xbf16> to vector<16x128xbf16>
      %c0_79 = arith.constant 0 : index
      %c0_80 = arith.constant 0 : index
      %137 = vector.load %arg7[%c0_79, %c0_80] : memref<128x32xbf16, #tpu.memory_space<vmem>>, vector<128x32xbf16>
      %cst_81 = arith.constant dense<0.000000e+00> : vector<16x32xf32>
      %138 = tpu.matmul %136, %137, %cst_81 {dimension_numbers = #tpu.dot_dimension_numbers<[1], [0], [0], [1], [0, 0, 1, 1], [], []>} : vector<16x128xbf16>, vector<128x32xbf16>, vector<16x32xf32> -> vector<16x32xf32>
      %139 = vector.extract_strided_slice %134 {offsets = [0, 0], sizes = [16, 8], strides = [1, 1]} : vector<16x32xf32> to vector<16x8xf32>
      %140 = arith.truncf %139 : vector<16x8xf32> to vector<16x8xbf16>
      %c0_82 = arith.constant 0 : index
      %c0_83 = arith.constant 0 : index
      %c0_84 = arith.constant 0 : index
      %141 = vector.load %arg12[%c0_82, %c0_83, %c0_84] : memref<4x16x8xbf16, #tpu.memory_space<vmem>>, vector<1x16x8xbf16>
      %142 = vector.shape_cast %141 : vector<1x16x8xbf16> to vector<16x8xbf16>
      %143 = vector.shape_cast %140 : vector<16x8xbf16> to vector<1x16x8xbf16>
      tpu.vector_store %arg12[%c0_82, %c0_83, %c0_84], %143 {strides = array<i32>} : memref<4x16x8xbf16, #tpu.memory_space<vmem>>, vector<1x16x8xbf16>,
      %144 = vector.extract_strided_slice %138 {offsets = [0, 0], sizes = [16, 8], strides = [1, 1]} : vector<16x32xf32> to vector<16x8xf32>
      %145 = arith.truncf %144 : vector<16x8xf32> to vector<16x8xbf16>
      %c0_85 = arith.constant 0 : index
      %c0_86 = arith.constant 0 : index
      %c0_87 = arith.constant 0 : index
      %146 = vector.load %arg13[%c0_85, %c0_86, %c0_87] : memref<4x16x8xbf16, #tpu.memory_space<vmem>>, vector<1x16x8xbf16>
      %147 = vector.shape_cast %146 : vector<1x16x8xbf16> to vector<16x8xbf16>
      %148 = vector.shape_cast %145 : vector<16x8xbf16> to vector<1x16x8xbf16>
      tpu.vector_store %arg13[%c0_85, %c0_86, %c0_87], %148 {strides = array<i32>} : memref<4x16x8xbf16, #tpu.memory_space<vmem>>, vector<1x16x8xbf16>,
      %149 = vector.extract_strided_slice %134 {offsets = [0, 8], sizes = [16, 8], strides = [1, 1]} : vector<16x32xf32> to vector<16x8xf32>
      %150 = arith.truncf %149 : vector<16x8xf32> to vector<16x8xbf16>
      %c1_88 = arith.constant 1 : index
      %c0_89 = arith.constant 0 : index
      %c0_90 = arith.constant 0 : index
      %151 = vector.load %arg12[%c1_88, %c0_89, %c0_90] : memref<4x16x8xbf16, #tpu.memory_space<vmem>>, vector<1x16x8xbf16>
      %152 = vector.shape_cast %151 : vector<1x16x8xbf16> to vector<16x8xbf16>
      %153 = vector.shape_cast %150 : vector<16x8xbf16> to vector<1x16x8xbf16>
      tpu.vector_store %arg12[%c1_88, %c0_89, %c0_90], %153 {strides = array<i32>} : memref<4x16x8xbf16, #tpu.memory_space<vmem>>, vector<1x16x8xbf16>,
      %154 = vector.extract_strided_slice %138 {offsets = [0, 8], sizes = [16, 8], strides = [1, 1]} : vector<16x32xf32> to vector<16x8xf32>
      %155 = arith.truncf %154 : vector<16x8xf32> to vector<16x8xbf16>
      %c1_91 = arith.constant 1 : index
      %c0_92 = arith.constant 0 : index
      %c0_93 = arith.constant 0 : index
      %156 = vector.load %arg13[%c1_91, %c0_92, %c0_93] : memref<4x16x8xbf16, #tpu.memory_space<vmem>>, vector<1x16x8xbf16>
      %157 = vector.shape_cast %156 : vector<1x16x8xbf16> to vector<16x8xbf16>
      %158 = vector.shape_cast %155 : vector<16x8xbf16> to vector<1x16x8xbf16>
      tpu.vector_store %arg13[%c1_91, %c0_92, %c0_93], %158 {strides = array<i32>} : memref<4x16x8xbf16, #tpu.memory_space<vmem>>, vector<1x16x8xbf16>,
      %159 = vector.extract_strided_slice %134 {offsets = [0, 16], sizes = [16, 8], strides = [1, 1]} : vector<16x32xf32> to vector<16x8xf32>
      %160 = arith.truncf %159 : vector<16x8xf32> to vector<16x8xbf16>
      %c2_94 = arith.constant 2 : index
      %c0_95 = arith.constant 0 : index
      %c0_96 = arith.constant 0 : index
      %161 = vector.load %arg12[%c2_94, %c0_95, %c0_96] : memref<4x16x8xbf16, #tpu.memory_space<vmem>>, vector<1x16x8xbf16>
      %162 = vector.shape_cast %161 : vector<1x16x8xbf16> to vector<16x8xbf16>
      %163 = vector.shape_cast %160 : vector<16x8xbf16> to vector<1x16x8xbf16>
      tpu.vector_store %arg12[%c2_94, %c0_95, %c0_96], %163 {strides = array<i32>} : memref<4x16x8xbf16, #tpu.memory_space<vmem>>, vector<1x16x8xbf16>,
      %164 = vector.extract_strided_slice %138 {offsets = [0, 16], sizes = [16, 8], strides = [1, 1]} : vector<16x32xf32> to vector<16x8xf32>
      %165 = arith.truncf %164 : vector<16x8xf32> to vector<16x8xbf16>
      %c2_97 = arith.constant 2 : index
      %c0_98 = arith.constant 0 : index
      %c0_99 = arith.constant 0 : index
      %166 = vector.load %arg13[%c2_97, %c0_98, %c0_99] : memref<4x16x8xbf16, #tpu.memory_space<vmem>>, vector<1x16x8xbf16>
      %167 = vector.shape_cast %166 : vector<1x16x8xbf16> to vector<16x8xbf16>
      %168 = vector.shape_cast %165 : vector<16x8xbf16> to vector<1x16x8xbf16>
      tpu.vector_store %arg13[%c2_97, %c0_98, %c0_99], %168 {strides = array<i32>} : memref<4x16x8xbf16, #tpu.memory_space<vmem>>, vector<1x16x8xbf16>,
      %169 = vector.extract_strided_slice %134 {offsets = [0, 24], sizes = [16, 8], strides = [1, 1]} : vector<16x32xf32> to vector<16x8xf32>
      %170 = arith.truncf %169 : vector<16x8xf32> to vector<16x8xbf16>
      %c3_100 = arith.constant 3 : index
      %c0_101 = arith.constant 0 : index
      %c0_102 = arith.constant 0 : index
      %171 = vector.load %arg12[%c3_100, %c0_101, %c0_102] : memref<4x16x8xbf16, #tpu.memory_space<vmem>>, vector<1x16x8xbf16>
      %172 = vector.shape_cast %171 : vector<1x16x8xbf16> to vector<16x8xbf16>
      %173 = vector.shape_cast %170 : vector<16x8xbf16> to vector<1x16x8xbf16>
      tpu.vector_store %arg12[%c3_100, %c0_101, %c0_102], %173 {strides = array<i32>} : memref<4x16x8xbf16, #tpu.memory_space<vmem>>, vector<1x16x8xbf16>,
      %174 = vector.extract_strided_slice %138 {offsets = [0, 24], sizes = [16, 8], strides = [1, 1]} : vector<16x32xf32> to vector<16x8xf32>
      %175 = arith.truncf %174 : vector<16x8xf32> to vector<16x8xbf16>
      %c3_103 = arith.constant 3 : index
      %c0_104 = arith.constant 0 : index
      %c0_105 = arith.constant 0 : index
      %176 = vector.load %arg13[%c3_103, %c0_104, %c0_105] : memref<4x16x8xbf16, #tpu.memory_space<vmem>>, vector<1x16x8xbf16>
      %177 = vector.shape_cast %176 : vector<1x16x8xbf16> to vector<16x8xbf16>
      %178 = vector.shape_cast %175 : vector<16x8xbf16> to vector<1x16x8xbf16>
      tpu.vector_store %arg13[%c3_103, %c0_104, %c0_105], %178 {strides = array<i32>} : memref<4x16x8xbf16, #tpu.memory_space<vmem>>, vector<1x16x8xbf16>,
    } else {
    }
    %c0 = arith.constant 0 : index
    %c0_1 = arith.constant 0 : index
    %c0_2 = arith.constant 0 : index
    %3 = vector.load %arg2[%c0, %c0_1, %c0_2] : memref<1x8x128xf32, #tpu.memory_space<vmem>>, vector<1x8x128xf32>
    %4 = vector.shape_cast %3 : vector<1x8x128xf32> to vector<8x128xf32>
    %5 = arith.truncf %4 : vector<8x128xf32> to vector<8x128xbf16>
    %c0_3 = arith.constant 0 : index
    %c0_4 = arith.constant 0 : index
    %6 = vector.load %arg5[%c0_3, %c0_4] : memref<128x32xbf16, #tpu.memory_space<vmem>>, vector<128x32xbf16>
    %cst = arith.constant dense<0.000000e+00> : vector<8x32xf32>
    %7 = tpu.matmul %5, %6, %cst {dimension_numbers = #tpu.dot_dimension_numbers<[1], [0], [0], [1], [0, 0, 1, 1], [], []>} : vector<8x128xbf16>, vector<128x32xbf16>, vector<8x32xf32> -> vector<8x32xf32>
    %8 = vector.extract_strided_slice %7 {offsets = [0, 0], sizes = [8, 8], strides = [1, 1]} : vector<8x32xf32> to vector<8x8xf32>
    %9 = arith.truncf %8 : vector<8x8xf32> to vector<8x8xbf16>
    %c0_5 = arith.constant 0 : index
    %c0_6 = arith.constant 0 : index
    %c0_7 = arith.constant 0 : index
    %10 = vector.load %arg12[%c0_5, %c0_6, %c0_7] : memref<4x16x8xbf16, #tpu.memory_space<vmem>>, vector<1x16x8xbf16>
    %11 = vector.shape_cast %10 : vector<1x16x8xbf16> to vector<16x8xbf16>
    %c0_8 = arith.constant 0 : index
    %c0_9 = arith.constant 0 : index
    %c0_10 = arith.constant 0 : index
    %12 = vector.load %arg13[%c0_8, %c0_9, %c0_10] : memref<4x16x8xbf16, #tpu.memory_space<vmem>>, vector<1x16x8xbf16>
    %13 = vector.shape_cast %12 : vector<1x16x8xbf16> to vector<16x8xbf16>
    %cst_11 = arith.constant dense<0.000000e+00> : vector<8x16xf32>
    %14 = tpu.matmul %9, %11, %cst_11 {dimension_numbers = #tpu.dot_dimension_numbers<[1], [1], [0], [0], [0, 0, 1, 0], [], []>} : vector<8x8xbf16>, vector<16x8xbf16>, vector<8x16xf32> -> vector<8x16xf32>
    %cst_12 = arith.constant dense<0xFF800000> : vector<8xf32>
    %15 = vector.multi_reduction <maximumf>, %14, %cst_12 [1] : vector<8x16xf32> to vector<8xf32>
    %16 = vector.shape_cast %15 : vector<8xf32> to vector<8x1xf32>
    %17 = vector.broadcast %16 : vector<8x1xf32> to vector<8x16xf32>
    %18 = arith.subf %14, %17 : vector<8x16xf32>
    %19 = math.exp %18 : vector<8x16xf32>
    %cst_13 = arith.constant dense<0.000000e+00> : vector<8xf32>
    %20 = vector.multi_reduction <add>, %19, %cst_13 [1] : vector<8x16xf32> to vector<8xf32>
    %21 = vector.shape_cast %20 : vector<8xf32> to vector<8x1xf32>
    %22 = arith.truncf %19 : vector<8x16xf32> to vector<8x16xbf16>
    %cst_14 = arith.constant dense<0.000000e+00> : vector<8x8xf32>
    %23 = tpu.matmul %22, %13, %cst_14 {dimension_numbers = #tpu.dot_dimension_numbers<[1], [0], [0], [1], [0, 0, 1, 1], [], []>} : vector<8x16xbf16>, vector<16x8xbf16>, vector<8x8xf32> -> vector<8x8xf32>
    %24 = tpu.reciprocal %21 {approx = true} : vector<8x1xf32> -> vector<8x1xf32>
    %25 = vector.broadcast %24 : vector<8x1xf32> to vector<8x8xf32>
    %26 = arith.mulf %23, %25 : vector<8x8xf32>
    %27 = arith.truncf %26 : vector<8x8xf32> to vector<8x8xbf16>
    %c0_15 = arith.constant 0 : index
    %c0_16 = arith.constant 0 : index
    %c0_17 = arith.constant 0 : index
    %28 = vector.load %arg8[%c0_15, %c0_16, %c0_17] : memref<4x8x128xbf16, #tpu.memory_space<vmem>>, vector<1x8x128xbf16>
    %29 = vector.shape_cast %28 : vector<1x8x128xbf16> to vector<8x128xbf16>
    %cst_18 = arith.constant dense<0.000000e+00> : vector<8x128xf32>
    %30 = tpu.matmul %27, %29, %cst_18 {dimension_numbers = #tpu.dot_dimension_numbers<[1], [0], [0], [1], [0, 0, 1, 1], [], []>} : vector<8x8xbf16>, vector<8x128xbf16>, vector<8x128xf32> -> vector<8x128xf32>
    %31 = arith.addf %4, %30 : vector<8x128xf32>
    %32 = vector.extract_strided_slice %7 {offsets = [0, 8], sizes = [8, 8], strides = [1, 1]} : vector<8x32xf32> to vector<8x8xf32>
    %33 = arith.truncf %32 : vector<8x8xf32> to vector<8x8xbf16>
    %c1 = arith.constant 1 : index
    %c0_19 = arith.constant 0 : index
    %c0_20 = arith.constant 0 : index
    %34 = vector.load %arg12[%c1, %c0_19, %c0_20] : memref<4x16x8xbf16, #tpu.memory_space<vmem>>, vector<1x16x8xbf16>
    %35 = vector.shape_cast %34 : vector<1x16x8xbf16> to vector<16x8xbf16>
    %c1_21 = arith.constant 1 : index
    %c0_22 = arith.constant 0 : index
    %c0_23 = arith.constant 0 : index
    %36 = vector.load %arg13[%c1_21, %c0_22, %c0_23] : memref<4x16x8xbf16, #tpu.memory_space<vmem>>, vector<1x16x8xbf16>
    %37 = vector.shape_cast %36 : vector<1x16x8xbf16> to vector<16x8xbf16>
    %cst_24 = arith.constant dense<0.000000e+00> : vector<8x16xf32>
    %38 = tpu.matmul %33, %35, %cst_24 {dimension_numbers = #tpu.dot_dimension_numbers<[1], [1], [0], [0], [0, 0, 1, 0], [], []>} : vector<8x8xbf16>, vector<16x8xbf16>, vector<8x16xf32> -> vector<8x16xf32>
    %cst_25 = arith.constant dense<0xFF800000> : vector<8xf32>
    %39 = vector.multi_reduction <maximumf>, %38, %cst_25 [1] : vector<8x16xf32> to vector<8xf32>
    %40 = vector.shape_cast %39 : vector<8xf32> to vector<8x1xf32>
    %41 = vector.broadcast %40 : vector<8x1xf32> to vector<8x16xf32>
    %42 = arith.subf %38, %41 : vector<8x16xf32>
    %43 = math.exp %42 : vector<8x16xf32>
    %cst_26 = arith.constant dense<0.000000e+00> : vector<8xf32>
    %44 = vector.multi_reduction <add>, %43, %cst_26 [1] : vector<8x16xf32> to vector<8xf32>
    %45 = vector.shape_cast %44 : vector<8xf32> to vector<8x1xf32>
    %46 = arith.truncf %43 : vector<8x16xf32> to vector<8x16xbf16>
    %cst_27 = arith.constant dense<0.000000e+00> : vector<8x8xf32>
    %47 = tpu.matmul %46, %37, %cst_27 {dimension_numbers = #tpu.dot_dimension_numbers<[1], [0], [0], [1], [0, 0, 1, 1], [], []>} : vector<8x16xbf16>, vector<16x8xbf16>, vector<8x8xf32> -> vector<8x8xf32>
    %48 = tpu.reciprocal %45 {approx = true} : vector<8x1xf32> -> vector<8x1xf32>
    %49 = vector.broadcast %48 : vector<8x1xf32> to vector<8x8xf32>
    %50 = arith.mulf %47, %49 : vector<8x8xf32>
    %51 = arith.truncf %50 : vector<8x8xf32> to vector<8x8xbf16>
    %c1_28 = arith.constant 1 : index
    %c0_29 = arith.constant 0 : index
    %c0_30 = arith.constant 0 : index
    %52 = vector.load %arg8[%c1_28, %c0_29, %c0_30] : memref<4x8x128xbf16, #tpu.memory_space<vmem>>, vector<1x8x128xbf16>
    %53 = vector.shape_cast %52 : vector<1x8x128xbf16> to vector<8x128xbf16>
    %cst_31 = arith.constant dense<0.000000e+00> : vector<8x128xf32>
    %54 = tpu.matmul %51, %53, %cst_31 {dimension_numbers = #tpu.dot_dimension_numbers<[1], [0], [0], [1], [0, 0, 1, 1], [], []>} : vector<8x8xbf16>, vector<8x128xbf16>, vector<8x128xf32> -> vector<8x128xf32>
    %55 = arith.addf %31, %54 : vector<8x128xf32>
    %56 = vector.extract_strided_slice %7 {offsets = [0, 16], sizes = [8, 8], strides = [1, 1]} : vector<8x32xf32> to vector<8x8xf32>
    %57 = arith.truncf %56 : vector<8x8xf32> to vector<8x8xbf16>
    %c2 = arith.constant 2 : index
    %c0_32 = arith.constant 0 : index
    %c0_33 = arith.constant 0 : index
    %58 = vector.load %arg12[%c2, %c0_32, %c0_33] : memref<4x16x8xbf16, #tpu.memory_space<vmem>>, vector<1x16x8xbf16>
    %59 = vector.shape_cast %58 : vector<1x16x8xbf16> to vector<16x8xbf16>
    %c2_34 = arith.constant 2 : index
    %c0_35 = arith.constant 0 : index
    %c0_36 = arith.constant 0 : index
    %60 = vector.load %arg13[%c2_34, %c0_35, %c0_36] : memref<4x16x8xbf16, #tpu.memory_space<vmem>>, vector<1x16x8xbf16>
    %61 = vector.shape_cast %60 : vector<1x16x8xbf16> to vector<16x8xbf16>
    %cst_37 = arith.constant dense<0.000000e+00> : vector<8x16xf32>
    %62 = tpu.matmul %57, %59, %cst_37 {dimension_numbers = #tpu.dot_dimension_numbers<[1], [1], [0], [0], [0, 0, 1, 0], [], []>} : vector<8x8xbf16>, vector<16x8xbf16>, vector<8x16xf32> -> vector<8x16xf32>
    %cst_38 = arith.constant dense<0xFF800000> : vector<8xf32>
    %63 = vector.multi_reduction <maximumf>, %62, %cst_38 [1] : vector<8x16xf32> to vector<8xf32>
    %64 = vector.shape_cast %63 : vector<8xf32> to vector<8x1xf32>
    %65 = vector.broadcast %64 : vector<8x1xf32> to vector<8x16xf32>
    %66 = arith.subf %62, %65 : vector<8x16xf32>
    %67 = math.exp %66 : vector<8x16xf32>
    %cst_39 = arith.constant dense<0.000000e+00> : vector<8xf32>
    %68 = vector.multi_reduction <add>, %67, %cst_39 [1] : vector<8x16xf32> to vector<8xf32>
    %69 = vector.shape_cast %68 : vector<8xf32> to vector<8x1xf32>
    %70 = arith.truncf %67 : vector<8x16xf32> to vector<8x16xbf16>
    %cst_40 = arith.constant dense<0.000000e+00> : vector<8x8xf32>
    %71 = tpu.matmul %70, %61, %cst_40 {dimension_numbers = #tpu.dot_dimension_numbers<[1], [0], [0], [1], [0, 0, 1, 1], [], []>} : vector<8x16xbf16>, vector<16x8xbf16>, vector<8x8xf32> -> vector<8x8xf32>
    %72 = tpu.reciprocal %69 {approx = true} : vector<8x1xf32> -> vector<8x1xf32>
    %73 = vector.broadcast %72 : vector<8x1xf32> to vector<8x8xf32>
    %74 = arith.mulf %71, %73 : vector<8x8xf32>
    %75 = arith.truncf %74 : vector<8x8xf32> to vector<8x8xbf16>
    %c2_41 = arith.constant 2 : index
    %c0_42 = arith.constant 0 : index
    %c0_43 = arith.constant 0 : index
    %76 = vector.load %arg8[%c2_41, %c0_42, %c0_43] : memref<4x8x128xbf16, #tpu.memory_space<vmem>>, vector<1x8x128xbf16>
    %77 = vector.shape_cast %76 : vector<1x8x128xbf16> to vector<8x128xbf16>
    %cst_44 = arith.constant dense<0.000000e+00> : vector<8x128xf32>
    %78 = tpu.matmul %75, %77, %cst_44 {dimension_numbers = #tpu.dot_dimension_numbers<[1], [0], [0], [1], [0, 0, 1, 1], [], []>} : vector<8x8xbf16>, vector<8x128xbf16>, vector<8x128xf32> -> vector<8x128xf32>
    %79 = arith.addf %55, %78 : vector<8x128xf32>
    %80 = vector.extract_strided_slice %7 {offsets = [0, 24], sizes = [8, 8], strides = [1, 1]} : vector<8x32xf32> to vector<8x8xf32>
    %81 = arith.truncf %80 : vector<8x8xf32> to vector<8x8xbf16>
    %c3 = arith.constant 3 : index
    %c0_45 = arith.constant 0 : index
    %c0_46 = arith.constant 0 : index
    %82 = vector.load %arg12[%c3, %c0_45, %c0_46] : memref<4x16x8xbf16, #tpu.memory_space<vmem>>, vector<1x16x8xbf16>
    %83 = vector.shape_cast %82 : vector<1x16x8xbf16> to vector<16x8xbf16>
    %c3_47 = arith.constant 3 : index
    %c0_48 = arith.constant 0 : index
    %c0_49 = arith.constant 0 : index
    %84 = vector.load %arg13[%c3_47, %c0_48, %c0_49] : memref<4x16x8xbf16, #tpu.memory_space<vmem>>, vector<1x16x8xbf16>
    %85 = vector.shape_cast %84 : vector<1x16x8xbf16> to vector<16x8xbf16>
    %cst_50 = arith.constant dense<0.000000e+00> : vector<8x16xf32>
    %86 = tpu.matmul %81, %83, %cst_50 {dimension_numbers = #tpu.dot_dimension_numbers<[1], [1], [0], [0], [0, 0, 1, 0], [], []>} : vector<8x8xbf16>, vector<16x8xbf16>, vector<8x16xf32> -> vector<8x16xf32>
    %cst_51 = arith.constant dense<0xFF800000> : vector<8xf32>
    %87 = vector.multi_reduction <maximumf>, %86, %cst_51 [1] : vector<8x16xf32> to vector<8xf32>
    %88 = vector.shape_cast %87 : vector<8xf32> to vector<8x1xf32>
    %89 = vector.broadcast %88 : vector<8x1xf32> to vector<8x16xf32>
    %90 = arith.subf %86, %89 : vector<8x16xf32>
    %91 = math.exp %90 : vector<8x16xf32>
    %cst_52 = arith.constant dense<0.000000e+00> : vector<8xf32>
    %92 = vector.multi_reduction <add>, %91, %cst_52 [1] : vector<8x16xf32> to vector<8xf32>
    %93 = vector.shape_cast %92 : vector<8xf32> to vector<8x1xf32>
    %94 = arith.truncf %91 : vector<8x16xf32> to vector<8x16xbf16>
    %cst_53 = arith.constant dense<0.000000e+00> : vector<8x8xf32>
    %95 = tpu.matmul %94, %85, %cst_53 {dimension_numbers = #tpu.dot_dimension_numbers<[1], [0], [0], [1], [0, 0, 1, 1], [], []>} : vector<8x16xbf16>, vector<16x8xbf16>, vector<8x8xf32> -> vector<8x8xf32>
    %96 = tpu.reciprocal %93 {approx = true} : vector<8x1xf32> -> vector<8x1xf32>
    %97 = vector.broadcast %96 : vector<8x1xf32> to vector<8x8xf32>
    %98 = arith.mulf %95, %97 : vector<8x8xf32>
    %99 = arith.truncf %98 : vector<8x8xf32> to vector<8x8xbf16>
    %c3_54 = arith.constant 3 : index
    %c0_55 = arith.constant 0 : index
    %c0_56 = arith.constant 0 : index
    %100 = vector.load %arg8[%c3_54, %c0_55, %c0_56] : memref<4x8x128xbf16, #tpu.memory_space<vmem>>, vector<1x8x128xbf16>
    %101 = vector.shape_cast %100 : vector<1x8x128xbf16> to vector<8x128xbf16>
    %cst_57 = arith.constant dense<0.000000e+00> : vector<8x128xf32>
    %102 = tpu.matmul %99, %101, %cst_57 {dimension_numbers = #tpu.dot_dimension_numbers<[1], [0], [0], [1], [0, 0, 1, 1], [], []>} : vector<8x8xbf16>, vector<8x128xbf16>, vector<8x128xf32> -> vector<8x128xf32>
    %103 = arith.addf %79, %102 : vector<8x128xf32>
    %cst_58 = arith.constant dense<0.000000e+00> : vector<8xf32>
    %104 = vector.multi_reduction <add>, %103, %cst_58 [1] : vector<8x128xf32> to vector<8xf32>
    %105 = vector.shape_cast %104 : vector<8xf32> to vector<8x1xf32>
    %cst_59 = arith.constant 3.125000e-02 : f32
    %106 = vector.broadcast %cst_59 : f32 to vector<8x1xf32>
    %107 = arith.mulf %105, %106 : vector<8x1xf32>
    %108 = arith.mulf %103, %103 : vector<8x128xf32>
    %cst_60 = arith.constant dense<0.000000e+00> : vector<8xf32>
    %109 = vector.multi_reduction <add>, %108, %cst_60 [1] : vector<8x128xf32> to vector<8xf32>
    %110 = vector.shape_cast %109 : vector<8xf32> to vector<8x1xf32>
    %cst_61 = arith.constant 3.125000e-02 : f32
    %111 = vector.broadcast %cst_61 : f32 to vector<8x1xf32>
    %112 = arith.mulf %110, %111 : vector<8x1xf32>
    %113 = arith.mulf %107, %107 : vector<8x1xf32>
    %114 = arith.subf %112, %113 : vector<8x1xf32>
    %115 = vector.broadcast %107 : vector<8x1xf32> to vector<8x128xf32>
    %116 = arith.subf %103, %115 : vector<8x128xf32>
    %cst_62 = arith.constant 9.99999997E-7 : f32
    %117 = vector.broadcast %cst_62 : f32 to vector<8x1xf32>
    %118 = arith.addf %114, %117 : vector<8x1xf32>
    %119 = math.rsqrt %118 : vector<8x1xf32>
    %120 = vector.broadcast %119 : vector<8x1xf32> to vector<8x128xf32>
    %121 = arith.mulf %116, %120 : vector<8x128xf32>
    %c0_63 = arith.constant 0 : index
    %c0_64 = arith.constant 0 : index
    %122 = vector.load %arg9[%c0_63, %c0_64] : memref<1x128xf32, #tpu.memory_space<vmem>>, vector<1x128xf32>
    %123 = vector.broadcast %122 : vector<1x128xf32> to vector<8x128xf32>
    %124 = arith.mulf %121, %123 : vector<8x128xf32>
    %c0_65 = arith.constant 0 : index
    %c0_66 = arith.constant 0 : index
    %125 = vector.load %arg10[%c0_65, %c0_66] : memref<1x128xf32, #tpu.memory_space<vmem>>, vector<1x128xf32>
    %126 = vector.broadcast %125 : vector<1x128xf32> to vector<8x128xf32>
    %127 = arith.addf %124, %126 : vector<8x128xf32>
    %c0_67 = arith.constant 0 : index
    %c0_68 = arith.constant 0 : index
    %c0_69 = arith.constant 0 : index
    %128 = vector.load %arg11[%c0_67, %c0_68, %c0_69] : memref<1x8x128xf32, #tpu.memory_space<vmem>>, vector<1x8x128xf32>
    %129 = vector.shape_cast %128 : vector<1x8x128xf32> to vector<8x128xf32>
    %130 = vector.shape_cast %127 : vector<8x128xf32> to vector<1x8x128xf32>
    tpu.vector_store %arg11[%c0_67, %c0_68, %c0_69], %130 {strides = array<i32>} : memref<1x8x128xf32, #tpu.memory_space<vmem>>, vector<1x8x128xf32>,
    return
  }
  func.func @transform_0(%arg0: i32, %arg1: i32) -> (i32, i32, i32) {
    %c0_i32 = arith.constant 0 : i32
    %c0_i32_0 = arith.constant 0 : i32
    return %arg0, %arg1, %c0_i32 : i32, i32, i32
  }
  func.func @transform_1(%arg0: i32, %arg1: i32) -> (i32, i32, i32) {
    %c0_i32 = arith.constant 0 : i32
    %c0_i32_0 = arith.constant 0 : i32
    %c0_i32_1 = arith.constant 0 : i32
    return %arg0, %c0_i32, %c0_i32_0 : i32, i32, i32
  }
  func.func @transform_2(%arg0: i32, %arg1: i32) -> (i32, i32, i32) {
    %c0_i32 = arith.constant 0 : i32
    %c0_i32_0 = arith.constant 0 : i32
    %c0_i32_1 = arith.constant 0 : i32
    return %arg0, %c0_i32, %c0_i32_0 : i32, i32, i32
  }
  func.func @transform_3(%arg0: i32, %arg1: i32) -> (i32, i32) {
    %c0_i32 = arith.constant 0 : i32
    %c0_i32_0 = arith.constant 0 : i32
    %c0_i32_1 = arith.constant 0 : i32
    return %c0_i32, %c0_i32_0 : i32, i32
  }
  func.func @transform_4(%arg0: i32, %arg1: i32) -> (i32, i32) {
    %c0_i32 = arith.constant 0 : i32
    %c0_i32_0 = arith.constant 0 : i32
    %c0_i32_1 = arith.constant 0 : i32
    return %c0_i32, %c0_i32_0 : i32, i32
  }
  func.func @transform_5(%arg0: i32, %arg1: i32) -> (i32, i32) {
    %c0_i32 = arith.constant 0 : i32
    %c0_i32_0 = arith.constant 0 : i32
    %c0_i32_1 = arith.constant 0 : i32
    return %c0_i32, %c0_i32_0 : i32, i32
  }
  func.func @transform_6(%arg0: i32, %arg1: i32) -> (i32, i32, i32) {
    %c0_i32 = arith.constant 0 : i32
    %c0_i32_0 = arith.constant 0 : i32
    %c0_i32_1 = arith.constant 0 : i32
    %c0_i32_2 = arith.constant 0 : i32
    return %c0_i32, %c0_i32_0, %c0_i32_1 : i32, i32, i32
  }
  func.func @transform_7(%arg0: i32, %arg1: i32) -> (i32, i32) {
    %c0_i32 = arith.constant 0 : i32
    %c0_i32_0 = arith.constant 0 : i32
    %c0_i32_1 = arith.constant 0 : i32
    return %c0_i32, %c0_i32_0 : i32, i32
  }
  func.func @transform_8(%arg0: i32, %arg1: i32) -> (i32, i32) {
    %c0_i32 = arith.constant 0 : i32
    %c0_i32_0 = arith.constant 0 : i32
    %c0_i32_1 = arith.constant 0 : i32
    return %c0_i32, %c0_i32_0 : i32, i32
  }
  func.func @transform_9(%arg0: i32, %arg1: i32) -> (i32, i32, i32) {
    %c0_i32 = arith.constant 0 : i32
    %c0_i32_0 = arith.constant 0 : i32
    return %arg0, %arg1, %c0_i32 : i32, i32, i32
  }
}

</mosaic_0001>

<llo_original>
// kernel: tpu_custom_call.1
$region0: #{tpu_custom_call.1}
  #allocation0 [shape = 'u32[]', space=smem, size = 0x4, offset = 0x4, fixed_abs, tag = 'smem constant byte address 0x4 - core index']
  #allocation1 [shape = 'u32[144,128]{1,0:T(1,128)}', space=vmem, size = 0x12000, scoped, tag = 'internal scratch']
  #allocation2 [shape = 'bf16[4,16,8]{2,1,0:T(16,128)(2,1)}', space=vmem, size = 0x4000, scoped, tag = 'scratch operand']
  #allocation3 [shape = 'bf16[4,16,8]{2,1,0:T(16,128)(2,1)}', space=vmem, size = 0x4000, scoped, tag = 'scratch operand']
  %s0 = inlined_call_operand.vmem [shape: f32[2,16,128], index: 0, kind: input, shape index: {}]
  %s1 = inlined_call_operand.vmem [shape: bf16[2,16,128], index: 1, kind: input, shape index: {}]
  %s2 = inlined_call_operand.vmem [shape: bf16[2,16,128], index: 2, kind: input, shape index: {}]
  %s3 = inlined_call_operand.vmem [shape: bf16[128,32], index: 3, kind: input, shape index: {}]
  %s4 = inlined_call_operand.vmem [shape: bf16[128,32], index: 4, kind: input, shape index: {}]
  %s5 = inlined_call_operand.vmem [shape: bf16[128,32], index: 5, kind: input, shape index: {}]
  %s6 = inlined_call_operand.vmem [shape: bf16[4,8,128], index: 6, kind: input, shape index: {}]
  %s7 = inlined_call_operand.vmem [shape: f32[1,128], index: 7, kind: input, shape index: {}]
  %s8 = inlined_call_operand.vmem [shape: f32[1,128], index: 8, kind: input, shape index: {}]
  %s9 = inlined_call_operand.hbm [shape: f32[2,16,128], index: 9, kind: output, shape index: {}]
  %s10 = sld [smem:[#allocation0]]
  $region73: #{tpu_custom_call.1} parent=0
    _
  %s12 = ssub.s32 1, %s10
  %s13 = scalar_select 0, %s12, %s10
  $region1: #{tpu_custom_call.1} parent=0
    #allocation4 [shape = 'u8[8192]{0}', space=vmem, size = 0x2000, scoped, tag = 'output window, operand 0']
    #allocation5 [shape = 's32[2]{0}', space=sflag, size = 0x8, scoped, tag = 'scoped memory for tpu_custom_call.1']
    %14 = vsyncpa [#allocation5], 0
    %s15 = scalar_lea.sflag [#allocation5], 1
    %16 = vsyncpa %s15, 0
    loop: start=0, step=1, limit=6
    $region2: #{tpu_custom_call.1} parent=1 // loop_pre_header
      _
    $region3: #{tpu_custom_call.1} parent=1 // loop_header
      %s18 = sphi 0, %s22
      %p19 = scmp.ge.s32.totalorder %s18, 6
      %s25 = sphi 0, %s37
      %s26 = sphi 0, %s33
      %s27 = sphi 0, %s25
      %s28 = sphi 0, %s26
      %s29 = sphi 0, %s27
      %s30 = sphi 0, %s28
      %s42 = sphi 0, %s44
      %s45 = sphi 0, %s42
      %s46 = sphi 0, %s45
      %s62 = sphi 0, %s46
      %s68 = sphi 0, %s70
      %s71 = sphi 0, %s68
      %s72 = sphi 0, %s71
      %s88 = sphi 0, %s72
      %s94 = sphi 0, %s96
      %s97 = sphi 0, %s94
      %s98 = sphi 0, %s97
      %s114 = sphi 0, %s98
      %s118 = sphi 0, %s118
      %s120 = sphi 0, %s118
      %s121 = sphi 0, %s120
      %s135 = sphi 0, %s121
      %s139 = sphi 0, %s139
      %s141 = sphi 0, %s139
      %s142 = sphi 0, %s141
      %s156 = sphi 0, %s142
      %s160 = sphi 0, %s160
      %s162 = sphi 0, %s160
      %s163 = sphi 0, %s162
      %s177 = sphi 0, %s163
      %s181 = sphi 0, %s181
      %s183 = sphi 0, %s181
      %s184 = sphi 0, %s183
      %s198 = sphi 0, %s184
      %s202 = sphi 0, %s202
      %s204 = sphi 0, %s202
      %s205 = sphi 0, %s204
      %s219 = sphi 0, %s205
      %s223 = sphi 0, %s223
      %s225 = sphi 0, %s223
      %s226 = sphi 0, %s225
      %s240 = sphi 0, %s226
      %s248 = sphi 0, %s250
      %s251 = sphi 0, %s248
      %s252 = sphi 0, %s251
      %s268 = sphi 0, %s252
    $region4: #{tpu_custom_call.1} parent=1 // loop_header_branch
      %21 = sbr.rel (%p19) target = $region8
    $region5: #{tpu_custom_call.1} parent=1 // loop_body
      %s23 = ssub.s32 %s18, 1
      %s24 = ssub.s32 %s18, 2
      %s31 = sadd.s32 1, %s26
      %p32 = scmp.ge.s32.totalorder %s31, 2
      %s33 = scalar_select %p32, 0, %s31
      %s34 = sadd.s32 1, %s25
      %s35 = scalar_select %p32, %s34, %s25
      %p36 = scmp.ge.s32.totalorder %s35, 2
      %s37 = scalar_select %p36, 0, %s35
      %s38 = ssub.s32 %s25, %s37
      %s39 = ssub.s32 %s26, %s33
      %s40 = sor.u32 %s38, %s39
      %p41 = scmp.eq.s32.totalorder %s40, 0
      %s43 = sadd.s32 %s42, 1
      %s44 = scalar_select %p41, %s42, %s43
      %p47 = pneg %p41
      %p48 = scmp.eq.s32.totalorder %s18, 3
      %p49 = por %p47, %p48
      %p50 = scmp.ne.s32.totalorder %s42, %s45
      %p51 = scmp.eq.s32.totalorder %s18, 0
      %p52 = por %p50, %p51
      %p53 = scmp.ne.s32.totalorder %s42, %s45
      %p54 = scmp.eq.s32.totalorder %s23, 3
      %p55 = por %p53, %p54
      %p56 = scmp.ne.s32.totalorder %s45, %s46
      %p57 = scmp.eq.s32.totalorder %s23, 0
      %p58 = por %p56, %p57
      %p59 = scmp.ne.s32.totalorder %s45, %s46
      %p60 = scmp.eq.s32.totalorder %s24, 3
      %p61 = por %p59, %p60
      %p63 = scmp.ne.s32.totalorder %s46, %s62
      %p64 = scmp.eq.s32.totalorder %s24, 0
      %p65 = por %p63, %p64
      %s66 = ssub.s32 %s25, %s37
      %p67 = scmp.eq.s32.totalorder %s66, 0
      %s69 = sadd.s32 %s68, 1
      %s70 = scalar_select %p67, %s68, %s69
      %p73 = pneg %p67
      %p74 = scmp.eq.s32.totalorder %s18, 3
      %p75 = por %p73, %p74
      %p76 = scmp.ne.s32.totalorder %s68, %s71
      %p77 = scmp.eq.s32.totalorder %s18, 0
      %p78 = por %p76, %p77
      %p79 = scmp.ne.s32.totalorder %s68, %s71
      %p80 = scmp.eq.s32.totalorder %s23, 3
      %p81 = por %p79, %p80
      %p82 = scmp.ne.s32.totalorder %s71, %s72
      %p83 = scmp.eq.s32.totalorder %s23, 0
      %p84 = por %p82, %p83
      %p85 = scmp.ne.s32.totalorder %s71, %s72
      %p86 = scmp.eq.s32.totalorder %s24, 3
      %p87 = por %p85, %p86
      %p89 = scmp.ne.s32.totalorder %s72, %s88
      %p90 = scmp.eq.s32.totalorder %s24, 0
      %p91 = por %p89, %p90
      %s92 = ssub.s32 %s25, %s37
      %p93 = scmp.eq.s32.totalorder %s92, 0
      %s95 = sadd.s32 %s94, 1
      %s96 = scalar_select %p93, %s94, %s95
      %p99 = pneg %p93
      %p100 = scmp.eq.s32.totalorder %s18, 3
      %p101 = por %p99, %p100
      %p102 = scmp.ne.s32.totalorder %s94, %s97
      %p103 = scmp.eq.s32.totalorder %s18, 0
      %p104 = por %p102, %p103
      %p105 = scmp.ne.s32.totalorder %s94, %s97
      %p106 = scmp.eq.s32.totalorder %s23, 3
      %p107 = por %p105, %p106
      %p108 = scmp.ne.s32.totalorder %s97, %s98
      %p109 = scmp.eq.s32.totalorder %s23, 0
      %p110 = por %p108, %p109
      %p111 = scmp.ne.s32.totalorder %s97, %s98
      %p112 = scmp.eq.s32.totalorder %s24, 3
      %p113 = por %p111, %p112
      %p115 = scmp.ne.s32.totalorder %s98, %s114
      %p116 = scmp.eq.s32.totalorder %s24, 0
      %p117 = por %p115, %p116
      %s119 = sadd.s32 %s118, 1
      %p122 = scmp.eq.s32.totalorder %s18, 3
      %p123 = scmp.ne.s32.totalorder %s118, %s120
      %p124 = scmp.eq.s32.totalorder %s18, 0
      %p125 = por %p123, %p124
      %p126 = scmp.ne.s32.totalorder %s118, %s120
      %p127 = scmp.eq.s32.totalorder %s23, 3
      %p128 = por %p126, %p127
      %p129 = scmp.ne.s32.totalorder %s120, %s121
      %p130 = scmp.eq.s32.totalorder %s23, 0
      %p131 = por %p129, %p130
      %p132 = scmp.ne.s32.totalorder %s120, %s121
      %p133 = scmp.eq.s32.totalorder %s24, 3
      %p134 = por %p132, %p133
      %p136 = scmp.ne.s32.totalorder %s121, %s135
      %p137 = scmp.eq.s32.totalorder %s24, 0
      %p138 = por %p136, %p137
      %s140 = sadd.s32 %s139, 1
      %p143 = scmp.eq.s32.totalorder %s18, 3
      %p144 = scmp.ne.s32.totalorder %s139, %s141
      %p145 = scmp.eq.s32.totalorder %s18, 0
      %p146 = por %p144, %p145
      %p147 = scmp.ne.s32.totalorder %s139, %s141
      %p148 = scmp.eq.s32.totalorder %s23, 3
      %p149 = por %p147, %p148
      %p150 = scmp.ne.s32.totalorder %s141, %s142
      %p151 = scmp.eq.s32.totalorder %s23, 0
      %p152 = por %p150, %p151
      %p153 = scmp.ne.s32.totalorder %s141, %s142
      %p154 = scmp.eq.s32.totalorder %s24, 3
      %p155 = por %p153, %p154
      %p157 = scmp.ne.s32.totalorder %s142, %s156
      %p158 = scmp.eq.s32.totalorder %s24, 0
      %p159 = por %p157, %p158
      %s161 = sadd.s32 %s160, 1
      %p164 = scmp.eq.s32.totalorder %s18, 3
      %p165 = scmp.ne.s32.totalorder %s160, %s162
      %p166 = scmp.eq.s32.totalorder %s18, 0
      %p167 = por %p165, %p166
      %p168 = scmp.ne.s32.totalorder %s160, %s162
      %p169 = scmp.eq.s32.totalorder %s23, 3
      %p170 = por %p168, %p169
      %p171 = scmp.ne.s32.totalorder %s162, %s163
      %p172 = scmp.eq.s32.totalorder %s23, 0
      %p173 = por %p171, %p172
      %p174 = scmp.ne.s32.totalorder %s162, %s163
      %p175 = scmp.eq.s32.totalorder %s24, 3
      %p176 = por %p174, %p175
      %p178 = scmp.ne.s32.totalorder %s163, %s177
      %p179 = scmp.eq.s32.totalorder %s24, 0
      %p180 = por %p178, %p179
      %s182 = sadd.s32 %s181, 1
      %p185 = scmp.eq.s32.totalorder %s18, 3
      %p186 = scmp.ne.s32.totalorder %s181, %s183
      %p187 = scmp.eq.s32.totalorder %s18, 0
      %p188 = por %p186, %p187
      %p189 = scmp.ne.s32.totalorder %s181, %s183
      %p190 = scmp.eq.s32.totalorder %s23, 3
      %p191 = por %p189, %p190
      %p192 = scmp.ne.s32.totalorder %s183, %s184
      %p193 = scmp.eq.s32.totalorder %s23, 0
      %p194 = por %p192, %p193
      %p195 = scmp.ne.s32.totalorder %s183, %s184
      %p196 = scmp.eq.s32.totalorder %s24, 3
      %p197 = por %p195, %p196
      %p199 = scmp.ne.s32.totalorder %s184, %s198
      %p200 = scmp.eq.s32.totalorder %s24, 0
      %p201 = por %p199, %p200
      %s203 = sadd.s32 %s202, 1
      %p206 = scmp.eq.s32.totalorder %s18, 3
      %p207 = scmp.ne.s32.totalorder %s202, %s204
      %p208 = scmp.eq.s32.totalorder %s18, 0
      %p209 = por %p207, %p208
      %p210 = scmp.ne.s32.totalorder %s202, %s204
      %p211 = scmp.eq.s32.totalorder %s23, 3
      %p212 = por %p210, %p211
      %p213 = scmp.ne.s32.totalorder %s204, %s205
      %p214 = scmp.eq.s32.totalorder %s23, 0
      %p215 = por %p213, %p214
      %p216 = scmp.ne.s32.totalorder %s204, %s205
      %p217 = scmp.eq.s32.totalorder %s24, 3
      %p218 = por %p216, %p217
      %p220 = scmp.ne.s32.totalorder %s205, %s219
      %p221 = scmp.eq.s32.totalorder %s24, 0
      %p222 = por %p220, %p221
      %s224 = sadd.s32 %s223, 1
      %p227 = scmp.eq.s32.totalorder %s18, 3
      %p228 = scmp.ne.s32.totalorder %s223, %s225
      %p229 = scmp.eq.s32.totalorder %s18, 0
      %p230 = por %p228, %p229
      %p231 = scmp.ne.s32.totalorder %s223, %s225
      %p232 = scmp.eq.s32.totalorder %s23, 3
      %p233 = por %p231, %p232
      %p234 = scmp.ne.s32.totalorder %s225, %s226
      %p235 = scmp.eq.s32.totalorder %s23, 0
      %p236 = por %p234, %p235
      %p237 = scmp.ne.s32.totalorder %s225, %s226
      %p238 = scmp.eq.s32.totalorder %s24, 3
      %p239 = por %p237, %p238
      %p241 = scmp.ne.s32.totalorder %s226, %s240
      %p242 = scmp.eq.s32.totalorder %s24, 0
      %p243 = por %p241, %p242
      %s244 = ssub.s32 %s25, %s37
      %s245 = ssub.s32 %s26, %s33
      %s246 = sor.u32 %s244, %s245
      %p247 = scmp.eq.s32.totalorder %s246, 0
      %s249 = sadd.s32 %s248, 1
      %s250 = scalar_select %p247, %s248, %s249
      %p253 = pneg %p247
      %p254 = scmp.eq.s32.totalorder %s18, 3
      %p255 = por %p253, %p254
      %p256 = scmp.ne.s32.totalorder %s248, %s251
      %p257 = scmp.eq.s32.totalorder %s18, 0
      %p258 = por %p256, %p257
      %p259 = scmp.ne.s32.totalorder %s248, %s251
      %p260 = scmp.eq.s32.totalorder %s23, 3
      %p261 = por %p259, %p260
      %p262 = scmp.ne.s32.totalorder %s251, %s252
      %p263 = scmp.eq.s32.totalorder %s23, 0
      %p264 = por %p262, %p263
      %p265 = scmp.ne.s32.totalorder %s251, %s252
      %p266 = scmp.eq.s32.totalorder %s24, 3
      %p267 = por %p265, %p266
      %p269 = scmp.ne.s32.totalorder %s252, %s268
      %p270 = scmp.eq.s32.totalorder %s24, 0
      %p271 = por %p269, %p270
      %p272 = scmp.le.s32.totalorder 1, %s18
      %p273 = scmp.lt.s32.totalorder %s18, 5
      %p274 = pnand %p272, %p273
      %p275 = pneg %p274
      // Predicated region
      $region9: #{tpu_custom_call.1} parent=5 // pred_check
        _
      $region10: #{tpu_custom_call.1} parent=5 // pred_check_branch
        %277 = sbr.rel (%p274) target = $region12
      $region11: #{tpu_custom_call.1} parent=5 // pred_region
        %s278 = ssub.s32 %s18, 1
        // Predicated region
        $region13: #{tpu_custom_call.1} parent=11 // pred_check
          %p279 = pneg %p131
        $region14: #{tpu_custom_call.1} parent=11 // pred_check_branch
          %281 = sbr.rel (%p279) target = $region16
        $region15: #{tpu_custom_call.1} parent=11 // pred_region
          _
        $region16: #{tpu_custom_call.1} parent=11 // pred_fallthru
          _
        // Predicated region
        $region17: #{tpu_custom_call.1} parent=11 // pred_check
          %p282 = pneg %p152
        $region18: #{tpu_custom_call.1} parent=11 // pred_check_branch
          %284 = sbr.rel (%p282) target = $region20
        $region19: #{tpu_custom_call.1} parent=11 // pred_region
          _
        $region20: #{tpu_custom_call.1} parent=11 // pred_fallthru
          _
        // Predicated region
        $region21: #{tpu_custom_call.1} parent=11 // pred_check
          %p285 = pneg %p173
        $region22: #{tpu_custom_call.1} parent=11 // pred_check_branch
          %287 = sbr.rel (%p285) target = $region24
        $region23: #{tpu_custom_call.1} parent=11 // pred_region
          _
        $region24: #{tpu_custom_call.1} parent=11 // pred_fallthru
          _
        // Predicated region
        $region25: #{tpu_custom_call.1} parent=11 // pred_check
          %p288 = pneg %p194
        $region26: #{tpu_custom_call.1} parent=11 // pred_check_branch
          %290 = sbr.rel (%p288) target = $region28
        $region27: #{tpu_custom_call.1} parent=11 // pred_region
          _
        $region28: #{tpu_custom_call.1} parent=11 // pred_fallthru
          _
        // Predicated region
        $region29: #{tpu_custom_call.1} parent=11 // pred_check
          %p291 = pneg %p215
        $region30: #{tpu_custom_call.1} parent=11 // pred_check_branch
          %293 = sbr.rel (%p291) target = $region32
        $region31: #{tpu_custom_call.1} parent=11 // pred_region
          _
        $region32: #{tpu_custom_call.1} parent=11 // pred_fallthru
          _
        // Predicated region
        $region33: #{tpu_custom_call.1} parent=11 // pred_check
          %p294 = pneg %p236
        $region34: #{tpu_custom_call.1} parent=11 // pred_check_branch
          %296 = sbr.rel (%p294) target = $region36
        $region35: #{tpu_custom_call.1} parent=11 // pred_region
          _
        $region36: #{tpu_custom_call.1} parent=11 // pred_fallthru
          _
      $region12: #{tpu_custom_call.1} parent=5 // pred_fallthru
        _
      %p297 = scmp.lt.s32.totalorder %s18, 4
      // Predicated region
      $region37: #{tpu_custom_call.1} parent=5 // pred_check
        %p298 = pneg %p297
      $region38: #{tpu_custom_call.1} parent=5 // pred_check_branch
        %300 = sbr.rel (%p298) target = $region40
      $region39: #{tpu_custom_call.1} parent=5 // pred_region
        // Predicated region
        $region41: #{tpu_custom_call.1} parent=39 // pred_check
          %p301 = pneg %p52
        $region42: #{tpu_custom_call.1} parent=39 // pred_check_branch
          %303 = sbr.rel (%p301) target = $region44
        $region43: #{tpu_custom_call.1} parent=39 // pred_region
          %p304 = scmp.lt.s32.totalorder %s25, 1
          %s305 = scalar_select %p304, %s25, 1
          %p306 = scmp.lt.s32.totalorder %s26, 1
          %s307 = scalar_select %p306, %s26, 1
          %s308 = smul.addr %s305, 2
          %s309 = sadd.s32 %s307, %s308
          %s310 = smul.addr %s309, 8
          %s311 = scalar_lea.vmem %s0, %s310
        $region44: #{tpu_custom_call.1} parent=39 // pred_fallthru
          _
        // Predicated region
        $region45: #{tpu_custom_call.1} parent=39 // pred_check
          %p312 = pneg %p78
        $region46: #{tpu_custom_call.1} parent=39 // pred_check_branch
          %314 = sbr.rel (%p312) target = $region48
        $region47: #{tpu_custom_call.1} parent=39 // pred_region
          %p315 = scmp.lt.s32.totalorder %s25, 1
          %s316 = scalar_select %p315, %s25, 1
          %s317 = smul.addr %s316, 2
          %s318 = smul.addr %s317, 4
          %s319 = scalar_lea.vmem %s1, %s318
        $region48: #{tpu_custom_call.1} parent=39 // pred_fallthru
          _
        // Predicated region
        $region49: #{tpu_custom_call.1} parent=39 // pred_check
          %p320 = pneg %p104
        $region50: #{tpu_custom_call.1} parent=39 // pred_check_branch
          %322 = sbr.rel (%p320) target = $region52
        $region51: #{tpu_custom_call.1} parent=39 // pred_region
          %p323 = scmp.lt.s32.totalorder %s25, 1
          %s324 = scalar_select %p323, %s25, 1
          %s325 = smul.addr %s324, 2
          %s326 = smul.addr %s325, 4
          %s327 = scalar_lea.vmem %s2, %s326
        $region52: #{tpu_custom_call.1} parent=39 // pred_fallthru
          _
      $region40: #{tpu_custom_call.1} parent=5 // pred_fallthru
        _
      %p328 = scmp.le.s32.totalorder 1, %s18
      %p329 = scmp.lt.s32.totalorder %s18, 5
      %p330 = pnand %p328, %p329
      %p331 = pneg %p330
      // Predicated region
      $region53: #{tpu_custom_call.1} parent=5 // pred_check
        _
      $region54: #{tpu_custom_call.1} parent=5 // pred_check_branch
        %333 = sbr.rel (%p330) target = $region56
      $region55: #{tpu_custom_call.1} parent=5 // pred_region
        %s334 = ssub.s32 %s18, 1
        %p335 = scmp.lt.s32.totalorder %s27, 1
        %s336 = scalar_select %p335, %s27, 1
        %p337 = scmp.lt.s32.totalorder %s28, 1
        %s338 = scalar_select %p337, %s28, 1
        %s339 = smul.addr %s336, 2
        %s340 = sadd.s32 %s338, %s339
        %s341 = smul.addr %s340, 8
        %s342 = scalar_lea.vmem %s0, %s341
        %p343 = pneg %p58
        %p344 = pneg %p55
        %p345 = scmp.lt.s32.totalorder %s27, 1
        %s346 = scalar_select %p345, %s27, 1
        %s347 = smul.addr %s346, 2
        %s348 = smul.addr %s347, 4
        %s349 = scalar_lea.vmem %s1, %s348
        %p350 = pneg %p84
        %p351 = pneg %p81
        %p352 = scmp.lt.s32.totalorder %s27, 1
        %s353 = scalar_select %p352, %s27, 1
        %s354 = smul.addr %s353, 2
        %s355 = smul.addr %s354, 4
        %s356 = scalar_lea.vmem %s2, %s355
        %p357 = pneg %p110
        %p358 = pneg %p107
        %p359 = pneg %p131
        %p360 = pneg %p128
        %p361 = pneg %p152
        %p362 = pneg %p149
        %p363 = pneg %p173
        %p364 = pneg %p170
        %p365 = pneg %p194
        %p366 = pneg %p191
        %p367 = pneg %p215
        %p368 = pneg %p212
        %p369 = pneg %p236
        %p370 = pneg %p233
        %p371 = pneg %p264
        %p372 = pneg %p261
        %s373 = sand.u32 %s251, 1
        %s374 = scalar_lea.sflag [#allocation5], %s373
        %s375 = sand.u32 %s251, 1
        %s376 = smul.addr %s375, 8
        %s377 = scalar_lea.vmem [#allocation4], %s376
        %p378 = scmp.lt.s32.totalorder %s27, 1
        %s379 = scalar_select %p378, %s27, 1
        %p380 = scmp.lt.s32.totalorder %s28, 1
        %s381 = scalar_select %p380, %s28, 1
        %s382 = smul.addr %s379, 2
        %s383 = sadd.s32 %s381, %s382
        %s384 = smul.addr %s383, 8
        %s385 = scalar_lea.vmem %s0, %s384
        %p386 = scmp.lt.s32.totalorder %s27, 1
        %s387 = scalar_select %p386, %s27, 1
        %s388 = smul.addr %s387, 2
        %s389 = smul.addr %s388, 4
        %s390 = scalar_lea.vmem %s1, %s389
        %p391 = scmp.lt.s32.totalorder %s27, 1
        %s392 = scalar_select %p391, %s27, 1
        %s393 = smul.addr %s392, 2
        %s394 = smul.addr %s393, 4
        %s395 = scalar_lea.vmem %s2, %s394
        %p397 = scmp.eq.s32.totalorder %s28, 0
        // Predicated region
        $region57: #{tpu_custom_call.1} parent=55 // pred_check
          %p398 = pneg %p397
        $region58: #{tpu_custom_call.1} parent=55 // pred_check_branch
          %400 = sbr.rel (%p398) target = $region60
        $region59: #{tpu_custom_call.1} parent=55 // pred_region
          %v401 = vld [vmem:[%s390] sm:$0xf]
          %v402 = vld [vmem:[%s390 + $0x4] sm:$0xf]
          %v403 = vld [vmem:[%s4] sm:$0xf]
          %v404 = vld [vmem:[%s4 + $0x4] sm:$0xf]
          %v405 = vld [vmem:[%s4 + $0x8] sm:$0xf]
          %v406 = vld [vmem:[%s4 + $0xc] sm:$0xf]
          %v407 = vld [vmem:[%s4 + $0x10] sm:$0xf]
          %v408 = vld [vmem:[%s4 + $0x14] sm:$0xf]
          %v409 = vld [vmem:[%s4 + $0x18] sm:$0xf]
          %v410 = vld [vmem:[%s4 + $0x1c] sm:$0xf]
          %v411 = vld [vmem:[%s4 + $0x20] sm:$0xf]
          %v412 = vld [vmem:[%s4 + $0x24] sm:$0xf]
          %v413 = vld [vmem:[%s4 + $0x28] sm:$0xf]
          %v414 = vld [vmem:[%s4 + $0x2c] sm:$0xf]
          %v415 = vld [vmem:[%s4 + $0x30] sm:$0xf]
          %v416 = vld [vmem:[%s4 + $0x34] sm:$0xf]
          %v417 = vld [vmem:[%s4 + $0x38] sm:$0xf]
          %v418 = vld [vmem:[%s4 + $0x3c] sm:$0xf]
          %v421 = vunpack.c.l.b16 %v401
          %v422 = vunpack.c.l.b16 %v402
          %v423 = vpack.c.b16 %v422, %v421
          %v441 = vunpack.c.l.b16 %v403
          %v442 = vunpack.c.l.b16 %v404
          %v443 = vunpack.c.l.b16 %v405
          %v444 = vunpack.c.l.b16 %v406
          %v445 = vunpack.c.l.b16 %v407
          %v446 = vunpack.c.l.b16 %v408
          %v447 = vunpack.c.l.b16 %v409
          %v448 = vunpack.c.l.b16 %v410
          %v449 = vunpack.c.l.b16 %v411
          %v450 = vunpack.c.l.b16 %v412
          %v451 = vunpack.c.l.b16 %v413
          %v452 = vunpack.c.l.b16 %v414
          %v453 = vunpack.c.l.b16 %v415
          %v454 = vunpack.c.l.b16 %v416
          %v455 = vunpack.c.l.b16 %v417
          %v456 = vunpack.c.l.b16 %v418
          %v457 = vpack.c.b16 %v442, %v441
          %v458 = vpack.c.b16 %v444, %v443
          %v459 = vpack.c.b16 %v446, %v445
          %v460 = vpack.c.b16 %v448, %v447
          %v461 = vpack.c.b16 %v450, %v449
          %v462 = vpack.c.b16 %v452, %v451
          %v463 = vpack.c.b16 %v454, %v453
          %v464 = vpack.c.b16 %v456, %v455
          %473 = vmatprep.subr.bf16.mxu0 0
          %474 = vmatpush1.bf16.msra.mxu0 %v457
          %475 = vmatprep.subr.bf16.mxu0 0
          %476 = vmatpush1.bf16.msra.mxu0 %v458
          %477 = vmatprep.subr.bf16.mxu0 0
          %478 = vmatpush1.bf16.msra.mxu0 %v459
          %479 = vmatprep.subr.bf16.mxu0 0
          %480 = vmatpush1.bf16.msra.mxu0 %v460
          %481 = vmatprep.subr.bf16.mxu0 0
          %482 = vmatpush1.bf16.msra.mxu0 %v461
          %483 = vmatprep.subr.bf16.mxu0 0
          %484 = vmatpush1.bf16.msra.mxu0 %v462
          %485 = vmatprep.subr.bf16.mxu0 0
          %486 = vmatpush1.bf16.msra.mxu0 %v463
          %487 = vmatprep.subr.bf16.mxu0 0
          %488 = vmatpush1.bf16.msra.mxu0 %v464
          %489 = vmatprep.subr.bf16.mxu0 0
          %490 = vmatpush1.bf16.msra.mxu0 0
          %491 = vmatprep.subr.bf16.mxu0 0
          %492 = vmatpush1.bf16.msra.mxu0 0
          %493 = vmatprep.subr.bf16.mxu0 0
          %494 = vmatpush1.bf16.msra.mxu0 0
          %495 = vmatprep.subr.bf16.mxu0 0
          %496 = vmatpush1.bf16.msra.mxu0 0
          %497 = vmatprep.subr.bf16.mxu0 0
          %498 = vmatpush1.bf16.msra.mxu0 0
          %499 = vmatprep.subr.bf16.mxu0 0
          %500 = vmatpush1.bf16.msra.mxu0 0
          %501 = vmatprep.subr.bf16.mxu0 0
          %502 = vmatpush1.bf16.msra.mxu0 0
          %503 = vmatprep.subr.bf16.mxu0 0
          %504 = vmatpush1.bf16.msra.mxu0 0
          %505 = vmatprep.mubr.bf16.mxu0 0
          %506 = vmatmul.mubr.bf16.gmra.mrb[0].mxu0 %v423
          %v507 = vpop.f32.mrb[0].mxu0
          %v508 = vadd.f32 0.0, %v507
          %v509 = vpop.f32.mrb[0].mxu0
          %v510 = vpop.f32.mrb[0].mxu0
          %v511 = vadd.f32 0.0, %v510
          %v512 = vpop.f32.mrb[0].mxu0
          %513 = vdwg.mxu0
          %v514 = vld [vmem:[%s395] sm:$0xf]
          %v515 = vld [vmem:[%s395 + $0x4] sm:$0xf]
          %v516 = vld [vmem:[%s5] sm:$0xf]
          %v517 = vld [vmem:[%s5 + $0x4] sm:$0xf]
          %v518 = vld [vmem:[%s5 + $0x8] sm:$0xf]
          %v519 = vld [vmem:[%s5 + $0xc] sm:$0xf]
          %v520 = vld [vmem:[%s5 + $0x10] sm:$0xf]
          %v521 = vld [vmem:[%s5 + $0x14] sm:$0xf]
          %v522 = vld [vmem:[%s5 + $0x18] sm:$0xf]
          %v523 = vld [vmem:[%s5 + $0x1c] sm:$0xf]
          %v524 = vld [vmem:[%s5 + $0x20] sm:$0xf]
          %v525 = vld [vmem:[%s5 + $0x24] sm:$0xf]
          %v526 = vld [vmem:[%s5 + $0x28] sm:$0xf]
          %v527 = vld [vmem:[%s5 + $0x2c] sm:$0xf]
          %v528 = vld [vmem:[%s5 + $0x30] sm:$0xf]
          %v529 = vld [vmem:[%s5 + $0x34] sm:$0xf]
          %v530 = vld [vmem:[%s5 + $0x38] sm:$0xf]
          %v531 = vld [vmem:[%s5 + $0x3c] sm:$0xf]
          %v534 = vunpack.c.l.b16 %v514
          %v535 = vunpack.c.l.b16 %v515
          %v536 = vpack.c.b16 %v535, %v534
          %v554 = vunpack.c.l.b16 %v516
          %v555 = vunpack.c.l.b16 %v517
          %v556 = vunpack.c.l.b16 %v518
          %v557 = vunpack.c.l.b16 %v519
          %v558 = vunpack.c.l.b16 %v520
          %v559 = vunpack.c.l.b16 %v521
          %v560 = vunpack.c.l.b16 %v522
          %v561 = vunpack.c.l.b16 %v523
          %v562 = vunpack.c.l.b16 %v524
          %v563 = vunpack.c.l.b16 %v525
          %v564 = vunpack.c.l.b16 %v526
          %v565 = vunpack.c.l.b16 %v527
          %v566 = vunpack.c.l.b16 %v528
          %v567 = vunpack.c.l.b16 %v529
          %v568 = vunpack.c.l.b16 %v530
          %v569 = vunpack.c.l.b16 %v531
          %v570 = vpack.c.b16 %v555, %v554
          %v571 = vpack.c.b16 %v557, %v556
          %v572 = vpack.c.b16 %v559, %v558
          %v573 = vpack.c.b16 %v561, %v560
          %v574 = vpack.c.b16 %v563, %v562
          %v575 = vpack.c.b16 %v565, %v564
          %v576 = vpack.c.b16 %v567, %v566
          %v577 = vpack.c.b16 %v569, %v568
          %586 = vmatprep.subr.bf16.mxu0 0
          %587 = vmatpush1.bf16.msra.mxu0 %v570
          %588 = vmatprep.subr.bf16.mxu0 0
          %589 = vmatpush1.bf16.msra.mxu0 %v571
          %590 = vmatprep.subr.bf16.mxu0 0
          %591 = vmatpush1.bf16.msra.mxu0 %v572
          %592 = vmatprep.subr.bf16.mxu0 0
          %593 = vmatpush1.bf16.msra.mxu0 %v573
          %594 = vmatprep.subr.bf16.mxu0 0
          %595 = vmatpush1.bf16.msra.mxu0 %v574
          %596 = vmatprep.subr.bf16.mxu0 0
          %597 = vmatpush1.bf16.msra.mxu0 %v575
          %598 = vmatprep.subr.bf16.mxu0 0
          %599 = vmatpush1.bf16.msra.mxu0 %v576
          %600 = vmatprep.subr.bf16.mxu0 0
          %601 = vmatpush1.bf16.msra.mxu0 %v577
          %602 = vmatprep.subr.bf16.mxu0 0
          %603 = vmatpush1.bf16.msra.mxu0 0
          %604 = vmatprep.subr.bf16.mxu0 0
          %605 = vmatpush1.bf16.msra.mxu0 0
          %606 = vmatprep.subr.bf16.mxu0 0
          %607 = vmatpush1.bf16.msra.mxu0 0
          %608 = vmatprep.subr.bf16.mxu0 0
          %609 = vmatpush1.bf16.msra.mxu0 0
          %610 = vmatprep.subr.bf16.mxu0 0
          %611 = vmatpush1.bf16.msra.mxu0 0
          %612 = vmatprep.subr.bf16.mxu0 0
          %613 = vmatpush1.bf16.msra.mxu0 0
          %614 = vmatprep.subr.bf16.mxu0 0
          %615 = vmatpush1.bf16.msra.mxu0 0
          %616 = vmatprep.subr.bf16.mxu0 0
          %617 = vmatpush1.bf16.msra.mxu0 0
          %618 = vmatprep.mubr.bf16.mxu0 0
          %619 = vmatmul.mubr.bf16.gmra.mrb[0].mxu0 %v536
          %v620 = vpop.f32.mrb[0].mxu0
          %v621 = vadd.f32 0.0, %v620
          %v622 = vpop.f32.mrb[0].mxu0
          %v623 = vpop.f32.mrb[0].mxu0
          %v624 = vadd.f32 0.0, %v623
          %v625 = vpop.f32.mrb[0].mxu0
          %626 = vdwg.mxu0
          %v627 = vpack.c.bf16 %v511, %v508
          %vm628 = vcmask 64512
          %629 = vst.msk [vmem:[#allocation2] sm:$0xff] %vm628, %v627
          %v630 = vpack.c.bf16 %v624, %v621
          %631 = vst.msk [vmem:[#allocation3] sm:$0xff] %vm628, %v630
          %633 = vrot.lane.b32.xlu0 %v627, 120
          %v634 = vpop.permute.xlu0 %633
          %s636 = scalar_lea.vmem [#allocation2], 8
          %637 = vst.msk [vmem:[%s636] sm:$0xff] %vm628, %v634
          %639 = vrot.lane.b32.xlu0 %v630, 120
          %v640 = vpop.permute.xlu0 %639
          %s642 = scalar_lea.vmem [#allocation3], 8
          %643 = vst.msk [vmem:[%s642] sm:$0xff] %vm628, %v640
          %644 = vrot.lane.b32.xlu0 %v627, 112
          %v645 = vpop.permute.xlu0 %644
          %s647 = scalar_lea.vmem [#allocation2], 16
          %648 = vst.msk [vmem:[%s647] sm:$0xff] %vm628, %v645
          %649 = vrot.lane.b32.xlu0 %v630, 112
          %v650 = vpop.permute.xlu0 %649
          %s652 = scalar_lea.vmem [#allocation3], 16
          %653 = vst.msk [vmem:[%s652] sm:$0xff] %vm628, %v650
          %654 = vrot.lane.b32.xlu0 %v627, 104
          %v655 = vpop.permute.xlu0 %654
          %s657 = scalar_lea.vmem [#allocation2], 24
          %658 = vst.msk [vmem:[%s657] sm:$0xff] %vm628, %v655
          %659 = vrot.lane.b32.xlu0 %v630, 104
          %v660 = vpop.permute.xlu0 %659
          %s662 = scalar_lea.vmem [#allocation3], 24
          %663 = vst.msk [vmem:[%s662] sm:$0xff] %vm628, %v660
        $region60: #{tpu_custom_call.1} parent=55 // pred_fallthru
          _
        %v664 = vld [vmem:[%s385] sm:$0xff]
        %v665 = vpack.c.bf16 %v664, %v664
        %v666 = vld [vmem:[%s3] sm:$0xf]
        %v667 = vld [vmem:[%s3 + $0x4] sm:$0xf]
        %v668 = vld [vmem:[%s3 + $0x8] sm:$0xf]
        %v669 = vld [vmem:[%s3 + $0xc] sm:$0xf]
        %v670 = vld [vmem:[%s3 + $0x10] sm:$0xf]
        %v671 = vld [vmem:[%s3 + $0x14] sm:$0xf]
        %v672 = vld [vmem:[%s3 + $0x18] sm:$0xf]
        %v673 = vld [vmem:[%s3 + $0x1c] sm:$0xf]
        %v674 = vld [vmem:[%s3 + $0x20] sm:$0xf]
        %v675 = vld [vmem:[%s3 + $0x24] sm:$0xf]
        %v676 = vld [vmem:[%s3 + $0x28] sm:$0xf]
        %v677 = vld [vmem:[%s3 + $0x2c] sm:$0xf]
        %v678 = vld [vmem:[%s3 + $0x30] sm:$0xf]
        %v679 = vld [vmem:[%s3 + $0x34] sm:$0xf]
        %v680 = vld [vmem:[%s3 + $0x38] sm:$0xf]
        %v681 = vld [vmem:[%s3 + $0x3c] sm:$0xf]
        %v698 = vunpack.c.l.b16 %v666
        %v699 = vunpack.c.l.b16 %v667
        %v700 = vunpack.c.l.b16 %v668
        %v701 = vunpack.c.l.b16 %v669
        %v702 = vunpack.c.l.b16 %v670
        %v703 = vunpack.c.l.b16 %v671
        %v704 = vunpack.c.l.b16 %v672
        %v705 = vunpack.c.l.b16 %v673
        %v706 = vunpack.c.l.b16 %v674
        %v707 = vunpack.c.l.b16 %v675
        %v708 = vunpack.c.l.b16 %v676
        %v709 = vunpack.c.l.b16 %v677
        %v710 = vunpack.c.l.b16 %v678
        %v711 = vunpack.c.l.b16 %v679
        %v712 = vunpack.c.l.b16 %v680
        %v713 = vunpack.c.l.b16 %v681
        %v714 = vpack.c.b16 %v699, %v698
        %v715 = vpack.c.b16 %v701, %v700
        %v716 = vpack.c.b16 %v703, %v702
        %v717 = vpack.c.b16 %v705, %v704
        %v718 = vpack.c.b16 %v707, %v706
        %v719 = vpack.c.b16 %v709, %v708
        %v720 = vpack.c.b16 %v711, %v710
        %v721 = vpack.c.b16 %v713, %v712
        %730 = vmatprep.subr.bf16.mxu0 0
        %731 = vmatpush1.bf16.msra.mxu0 %v714
        %732 = vmatprep.subr.bf16.mxu0 0
        %733 = vmatpush1.bf16.msra.mxu0 %v715
        %734 = vmatprep.subr.bf16.mxu0 0
        %735 = vmatpush1.bf16.msra.mxu0 %v716
        %736 = vmatprep.subr.bf16.mxu0 0
        %737 = vmatpush1.bf16.msra.mxu0 %v717
        %738 = vmatprep.subr.bf16.mxu0 0
        %739 = vmatpush1.bf16.msra.mxu0 %v718
        %740 = vmatprep.subr.bf16.mxu0 0
        %741 = vmatpush1.bf16.msra.mxu0 %v719
        %742 = vmatprep.subr.bf16.mxu0 0
        %743 = vmatpush1.bf16.msra.mxu0 %v720
        %744 = vmatprep.subr.bf16.mxu0 0
        %745 = vmatpush1.bf16.msra.mxu0 %v721
        %746 = vmatprep.subr.bf16.mxu0 0
        %747 = vmatpush1.bf16.msra.mxu0 0
        %748 = vmatprep.subr.bf16.mxu0 0
        %749 = vmatpush1.bf16.msra.mxu0 0
        %750 = vmatprep.subr.bf16.mxu0 0
        %751 = vmatpush1.bf16.msra.mxu0 0
        %752 = vmatprep.subr.bf16.mxu0 0
        %753 = vmatpush1.bf16.msra.mxu0 0
        %754 = vmatprep.subr.bf16.mxu0 0
        %755 = vmatpush1.bf16.msra.mxu0 0
        %756 = vmatprep.subr.bf16.mxu0 0
        %757 = vmatpush1.bf16.msra.mxu0 0
        %758 = vmatprep.subr.bf16.mxu0 0
        %759 = vmatpush1.bf16.msra.mxu0 0
        %760 = vmatprep.subr.bf16.mxu0 0
        %761 = vmatpush1.bf16.msra.mxu0 0
        %762 = vmatprep.mubr.bf16.mxu0 0
        %763 = vmatmul.mubr.bf16.gmra.mrb[0].mxu0 %v665
        %v764 = vpop.f32.mrb[0].mxu0
        %v765 = vadd.f32 0.0, %v764
        %v766 = vpop.f32.mrb[0].mxu0
        %v767 = vpop.f32.mrb[0].mxu0
        %v768 = vpop.f32.mrb[0].mxu0
        %769 = vdwg.mxu0
        %v770 = vpack.c.bf16 %v765, %v765
        %v771 = vld [vmem:[#allocation2] sm:$0xff]
        %v772 = vld [vmem:[#allocation3] sm:$0xff]
        %vm773 = vcmask 64512
        %v775 = vsel %vm773, %v770, 0
        %v778 = vsel %vm773, %v771, 0
        %780 = vmatprep.subr.bf16.mxu0 0
        %781 = vmatpush1.bf16.xpose.msra.mxu0 %v778
        %782 = vmatprep.subr.bf16.mxu0 0
        %783 = vmatpush1.bf16.xpose.msra.mxu0 0
        %784 = vmatprep.subr.bf16.mxu0 0
        %785 = vmatpush1.bf16.xpose.msra.mxu0 0
        %786 = vmatprep.subr.bf16.mxu0 0
        %787 = vmatpush1.bf16.xpose.msra.mxu0 0
        %788 = vmatprep.subr.bf16.mxu0 0
        %789 = vmatpush1.bf16.xpose.msra.mxu0 0
        %790 = vmatprep.subr.bf16.mxu0 0
        %791 = vmatpush1.bf16.xpose.msra.mxu0 0
        %792 = vmatprep.subr.bf16.mxu0 0
        %793 = vmatpush1.bf16.xpose.msra.mxu0 0
        %794 = vmatprep.subr.bf16.mxu0 0
        %795 = vmatpush1.bf16.xpose.msra.mxu0 0
        %796 = vmatprep.subr.bf16.mxu0 0
        %797 = vmatpush1.bf16.xpose.msra.mxu0 0
        %798 = vmatprep.subr.bf16.mxu0 0
        %799 = vmatpush1.bf16.xpose.msra.mxu0 0
        %800 = vmatprep.subr.bf16.mxu0 0
        %801 = vmatpush1.bf16.xpose.msra.mxu0 0
        %802 = vmatprep.subr.bf16.mxu0 0
        %803 = vmatpush1.bf16.xpose.msra.mxu0 0
        %804 = vmatprep.subr.bf16.mxu0 0
        %805 = vmatpush1.bf16.xpose.msra.mxu0 0
        %806 = vmatprep.subr.bf16.mxu0 0
        %807 = vmatpush1.bf16.xpose.msra.mxu0 0
        %808 = vmatprep.subr.bf16.mxu0 0
        %809 = vmatpush1.bf16.xpose.msra.mxu0 0
        %810 = vmatprep.subr.bf16.mxu0 0
        %811 = vmatpush1.bf16.xpose.msra.mxu0 0
        %812 = vmatprep.mubr.bf16.mxu0 0
        %813 = vmatmul.mubr.bf16.gmra.mrb[0].mxu0 %v775
        %v814 = vpop.f32.mrb[0].mxu0
        %v815 = vadd.f32 0.0, %v814
        %v816 = vpop.f32.mrb[0].mxu0
        %v817 = vpop.f32.mrb[0].mxu0
        %v818 = vpop.f32.mrb[0].mxu0
        %819 = vdwg.mxu0
        %vm820 = vcmask 130048
        %v821 = vsel %vm820, %v815, -inf
        %822 = vmax.xlane.f32.xlu0 %v821
        %v823 = vpop.xlane.xlu0 %822
        %v824 = vsub.f32 %v815, %v823
        %v825 = vmul.f32 %v824, 1.442695
        %v826 = vpow.pop %v825
        %v827 = vsel %vm820, %v826, 0.0
        %828 = vadd.xlane.f32.xlu0 %v827
        %v829 = vpop.xlane.xlu0 %828
        %v830 = vpack.c.bf16 %v826, %v826
        %v832 = vsel %vm820, %v830, 0
        %834 = vmatprep.subr.bf16.mxu0 0
        %835 = vmatpush1.bf16.msra.mxu0 %v772
        %836 = vmatprep.subr.bf16.mxu0 0
        %837 = vmatpush1.bf16.msra.mxu0 0
        %838 = vmatprep.subr.bf16.mxu0 0
        %839 = vmatpush1.bf16.msra.mxu0 0
        %840 = vmatprep.subr.bf16.mxu0 0
        %841 = vmatpush1.bf16.msra.mxu0 0
        %842 = vmatprep.subr.bf16.mxu0 0
        %843 = vmatpush1.bf16.msra.mxu0 0
        %844 = vmatprep.subr.bf16.mxu0 0
        %845 = vmatpush1.bf16.msra.mxu0 0
        %846 = vmatprep.subr.bf16.mxu0 0
        %847 = vmatpush1.bf16.msra.mxu0 0
        %848 = vmatprep.subr.bf16.mxu0 0
        %849 = vmatpush1.bf16.msra.mxu0 0
        %850 = vmatprep.subr.bf16.mxu0 0
        %851 = vmatpush1.bf16.msra.mxu0 0
        %852 = vmatprep.subr.bf16.mxu0 0
        %853 = vmatpush1.bf16.msra.mxu0 0
        %854 = vmatprep.subr.bf16.mxu0 0
        %855 = vmatpush1.bf16.msra.mxu0 0
        %856 = vmatprep.subr.bf16.mxu0 0
        %857 = vmatpush1.bf16.msra.mxu0 0
        %858 = vmatprep.subr.bf16.mxu0 0
        %859 = vmatpush1.bf16.msra.mxu0 0
        %860 = vmatprep.subr.bf16.mxu0 0
        %861 = vmatpush1.bf16.msra.mxu0 0
        %862 = vmatprep.subr.bf16.mxu0 0
        %863 = vmatpush1.bf16.msra.mxu0 0
        %864 = vmatprep.subr.bf16.mxu0 0
        %865 = vmatpush1.bf16.msra.mxu0 0
        %866 = vmatprep.mubr.bf16.mxu0 0
        %867 = vmatmul.mubr.bf16.gmra.mrb[0].mxu0 %v832
        %v868 = vpop.f32.mrb[0].mxu0
        %v869 = vadd.f32 0.0, %v868
        %v870 = vpop.f32.mrb[0].mxu0
        %v871 = vpop.f32.mrb[0].mxu0
        %v872 = vpop.f32.mrb[0].mxu0
        %873 = vdwg.mxu0
        %v874 = vrcp.pop %v829
        %v875 = vmul.f32 %v869, %v874
        %v876 = vpack.c.bf16 %v875, %v875
        %v877 = vld [vmem:[%s6] sm:$0xf]
        %v879 = vsel %vm773, %v876, 0
        %vm881 = vcmask 1043456
        %v883 = vsel %vm881, %v877, 0
        %885 = vmatprep.subr.bf16.mxu0 0
        %886 = vmatpush1.bf16.msra.mxu0 %v883
        %887 = vmatprep.subr.bf16.mxu0 0
        %888 = vmatpush1.bf16.msra.mxu0 0
        %889 = vmatprep.subr.bf16.mxu0 0
        %890 = vmatpush1.bf16.msra.mxu0 0
        %891 = vmatprep.subr.bf16.mxu0 0
        %892 = vmatpush1.bf16.msra.mxu0 0
        %893 = vmatprep.subr.bf16.mxu0 0
        %894 = vmatpush1.bf16.msra.mxu0 0
        %895 = vmatprep.subr.bf16.mxu0 0
        %896 = vmatpush1.bf16.msra.mxu0 0
        %897 = vmatprep.subr.bf16.mxu0 0
        %898 = vmatpush1.bf16.msra.mxu0 0
        %899 = vmatprep.subr.bf16.mxu0 0
        %900 = vmatpush1.bf16.msra.mxu0 0
        %901 = vmatprep.subr.bf16.mxu0 0
        %902 = vmatpush1.bf16.msra.mxu0 0
        %903 = vmatprep.subr.bf16.mxu0 0
        %904 = vmatpush1.bf16.msra.mxu0 0
        %905 = vmatprep.subr.bf16.mxu0 0
        %906 = vmatpush1.bf16.msra.mxu0 0
        %907 = vmatprep.subr.bf16.mxu0 0
        %908 = vmatpush1.bf16.msra.mxu0 0
        %909 = vmatprep.subr.bf16.mxu0 0
        %910 = vmatpush1.bf16.msra.mxu0 0
        %911 = vmatprep.subr.bf16.mxu0 0
        %912 = vmatpush1.bf16.msra.mxu0 0
        %913 = vmatprep.subr.bf16.mxu0 0
        %914 = vmatpush1.bf16.msra.mxu0 0
        %915 = vmatprep.subr.bf16.mxu0 0
        %916 = vmatpush1.bf16.msra.mxu0 0
        %917 = vmatprep.mubr.bf16.mxu0 0
        %918 = vmatmul.mubr.bf16.gmra.mrb[0].mxu0 %v879
        %v919 = vpop.f32.mrb[0].mxu0
        %v920 = vadd.f32 0.0, %v919
        %v921 = vpop.f32.mrb[0].mxu0
        %v922 = vpop.f32.mrb[0].mxu0
        %v923 = vpop.f32.mrb[0].mxu0
        %924 = vdwg.mxu0
        %v925 = vadd.f32 %v664, %v920
        %s926 = scalar_lea.vmem [#allocation2], 8
        %v927 = vld [vmem:[%s926] sm:$0xff]
        %s928 = scalar_lea.vmem [#allocation3], 8
        %v929 = vld [vmem:[%s928] sm:$0xff]
        %931 = vrot.lane.b32.xlu0 %v770, 120
        %v932 = vpop.permute.xlu0 %931
        %v934 = vsel %vm773, %v932, 0
        %v937 = vsel %vm773, %v927, 0
        %939 = vmatprep.subr.bf16.mxu0 0
        %940 = vmatpush1.bf16.xpose.msra.mxu0 %v937
        %941 = vmatprep.subr.bf16.mxu0 0
        %942 = vmatpush1.bf16.xpose.msra.mxu0 0
        %943 = vmatprep.subr.bf16.mxu0 0
        %944 = vmatpush1.bf16.xpose.msra.mxu0 0
        %945 = vmatprep.subr.bf16.mxu0 0
        %946 = vmatpush1.bf16.xpose.msra.mxu0 0
        %947 = vmatprep.subr.bf16.mxu0 0
        %948 = vmatpush1.bf16.xpose.msra.mxu0 0
        %949 = vmatprep.subr.bf16.mxu0 0
        %950 = vmatpush1.bf16.xpose.msra.mxu0 0
        %951 = vmatprep.subr.bf16.mxu0 0
        %952 = vmatpush1.bf16.xpose.msra.mxu0 0
        %953 = vmatprep.subr.bf16.mxu0 0
        %954 = vmatpush1.bf16.xpose.msra.mxu0 0
        %955 = vmatprep.subr.bf16.mxu0 0
        %956 = vmatpush1.bf16.xpose.msra.mxu0 0
        %957 = vmatprep.subr.bf16.mxu0 0
        %958 = vmatpush1.bf16.xpose.msra.mxu0 0
        %959 = vmatprep.subr.bf16.mxu0 0
        %960 = vmatpush1.bf16.xpose.msra.mxu0 0
        %961 = vmatprep.subr.bf16.mxu0 0
        %962 = vmatpush1.bf16.xpose.msra.mxu0 0
        %963 = vmatprep.subr.bf16.mxu0 0
        %964 = vmatpush1.bf16.xpose.msra.mxu0 0
        %965 = vmatprep.subr.bf16.mxu0 0
        %966 = vmatpush1.bf16.xpose.msra.mxu0 0
        %967 = vmatprep.subr.bf16.mxu0 0
        %968 = vmatpush1.bf16.xpose.msra.mxu0 0
        %969 = vmatprep.subr.bf16.mxu0 0
        %970 = vmatpush1.bf16.xpose.msra.mxu0 0
        %971 = vmatprep.mubr.bf16.mxu0 0
        %972 = vmatmul.mubr.bf16.gmra.mrb[0].mxu0 %v934
        %v973 = vpop.f32.mrb[0].mxu0
        %v974 = vadd.f32 0.0, %v973
        %v975 = vpop.f32.mrb[0].mxu0
        %v976 = vpop.f32.mrb[0].mxu0
        %v977 = vpop.f32.mrb[0].mxu0
        %978 = vdwg.mxu0
        %v979 = vsel %vm820, %v974, -inf
        %980 = vmax.xlane.f32.xlu0 %v979
        %v981 = vpop.xlane.xlu0 %980
        %v982 = vsub.f32 %v974, %v981
        %v983 = vmul.f32 %v982, 1.442695
        %v984 = vpow.pop %v983
        %v985 = vsel %vm820, %v984, 0.0
        %986 = vadd.xlane.f32.xlu0 %v985
        %v987 = vpop.xlane.xlu0 %986
        %v988 = vpack.c.bf16 %v984, %v984
        %v990 = vsel %vm820, %v988, 0
        %992 = vmatprep.subr.bf16.mxu0 0
        %993 = vmatpush1.bf16.msra.mxu0 %v929
        %994 = vmatprep.subr.bf16.mxu0 0
        %995 = vmatpush1.bf16.msra.mxu0 0
        %996 = vmatprep.subr.bf16.mxu0 0
        %997 = vmatpush1.bf16.msra.mxu0 0
        %998 = vmatprep.subr.bf16.mxu0 0
        %999 = vmatpush1.bf16.msra.mxu0 0
        %1000 = vmatprep.subr.bf16.mxu0 0
        %1001 = vmatpush1.bf16.msra.mxu0 0
        %1002 = vmatprep.subr.bf16.mxu0 0
        %1003 = vmatpush1.bf16.msra.mxu0 0
        %1004 = vmatprep.subr.bf16.mxu0 0
        %1005 = vmatpush1.bf16.msra.mxu0 0
        %1006 = vmatprep.subr.bf16.mxu0 0
        %1007 = vmatpush1.bf16.msra.mxu0 0
        %1008 = vmatprep.subr.bf16.mxu0 0
        %1009 = vmatpush1.bf16.msra.mxu0 0
        %1010 = vmatprep.subr.bf16.mxu0 0
        %1011 = vmatpush1.bf16.msra.mxu0 0
        %1012 = vmatprep.subr.bf16.mxu0 0
        %1013 = vmatpush1.bf16.msra.mxu0 0
        %1014 = vmatprep.subr.bf16.mxu0 0
        %1015 = vmatpush1.bf16.msra.mxu0 0
        %1016 = vmatprep.subr.bf16.mxu0 0
        %1017 = vmatpush1.bf16.msra.mxu0 0
        %1018 = vmatprep.subr.bf16.mxu0 0
        %1019 = vmatpush1.bf16.msra.mxu0 0
        %1020 = vmatprep.subr.bf16.mxu0 0
        %1021 = vmatpush1.bf16.msra.mxu0 0
        %1022 = vmatprep.subr.bf16.mxu0 0
        %1023 = vmatpush1.bf16.msra.mxu0 0
        %1024 = vmatprep.mubr.bf16.mxu0 0
        %1025 = vmatmul.mubr.bf16.gmra.mrb[0].mxu0 %v990
        %v1026 = vpop.f32.mrb[0].mxu0
        %v1027 = vadd.f32 0.0, %v1026
        %v1028 = vpop.f32.mrb[0].mxu0
        %v1029 = vpop.f32.mrb[0].mxu0
        %v1030 = vpop.f32.mrb[0].mxu0
        %1031 = vdwg.mxu0
        %v1032 = vrcp.pop %v987
        %v1033 = vmul.f32 %v1027, %v1032
        %v1034 = vpack.c.bf16 %v1033, %v1033
        %s1035 = scalar_lea.vmem %s6, 4
        %v1036 = vld [vmem:[%s1035] sm:$0xf]
        %v1038 = vsel %vm773, %v1034, 0
        %v1041 = vsel %vm881, %v1036, 0
        %1043 = vmatprep.subr.bf16.mxu0 0
        %1044 = vmatpush1.bf16.msra.mxu0 %v1041
        %1045 = vmatprep.subr.bf16.mxu0 0
        %1046 = vmatpush1.bf16.msra.mxu0 0
        %1047 = vmatprep.subr.bf16.mxu0 0
        %1048 = vmatpush1.bf16.msra.mxu0 0
        %1049 = vmatprep.subr.bf16.mxu0 0
        %1050 = vmatpush1.bf16.msra.mxu0 0
        %1051 = vmatprep.subr.bf16.mxu0 0
        %1052 = vmatpush1.bf16.msra.mxu0 0
        %1053 = vmatprep.subr.bf16.mxu0 0
        %1054 = vmatpush1.bf16.msra.mxu0 0
        %1055 = vmatprep.subr.bf16.mxu0 0
        %1056 = vmatpush1.bf16.msra.mxu0 0
        %1057 = vmatprep.subr.bf16.mxu0 0
        %1058 = vmatpush1.bf16.msra.mxu0 0
        %1059 = vmatprep.subr.bf16.mxu0 0
        %1060 = vmatpush1.bf16.msra.mxu0 0
        %1061 = vmatprep.subr.bf16.mxu0 0
        %1062 = vmatpush1.bf16.msra.mxu0 0
        %1063 = vmatprep.subr.bf16.mxu0 0
        %1064 = vmatpush1.bf16.msra.mxu0 0
        %1065 = vmatprep.subr.bf16.mxu0 0
        %1066 = vmatpush1.bf16.msra.mxu0 0
        %1067 = vmatprep.subr.bf16.mxu0 0
        %1068 = vmatpush1.bf16.msra.mxu0 0
        %1069 = vmatprep.subr.bf16.mxu0 0
        %1070 = vmatpush1.bf16.msra.mxu0 0
        %1071 = vmatprep.subr.bf16.mxu0 0
        %1072 = vmatpush1.bf16.msra.mxu0 0
        %1073 = vmatprep.subr.bf16.mxu0 0
        %1074 = vmatpush1.bf16.msra.mxu0 0
        %1075 = vmatprep.mubr.bf16.mxu0 0
        %1076 = vmatmul.mubr.bf16.gmra.mrb[0].mxu0 %v1038
        %v1077 = vpop.f32.mrb[0].mxu0
        %v1078 = vadd.f32 0.0, %v1077
        %v1079 = vpop.f32.mrb[0].mxu0
        %v1080 = vpop.f32.mrb[0].mxu0
        %v1081 = vpop.f32.mrb[0].mxu0
        %1082 = vdwg.mxu0
        %v1083 = vadd.f32 %v925, %v1078
        %s1084 = scalar_lea.vmem [#allocation2], 16
        %v1085 = vld [vmem:[%s1084] sm:$0xff]
        %s1086 = scalar_lea.vmem [#allocation3], 16
        %v1087 = vld [vmem:[%s1086] sm:$0xff]
        %1088 = vrot.lane.b32.xlu0 %v770, 112
        %v1089 = vpop.permute.xlu0 %1088
        %v1091 = vsel %vm773, %v1089, 0
        %v1094 = vsel %vm773, %v1085, 0
        %1096 = vmatprep.subr.bf16.mxu0 0
        %1097 = vmatpush1.bf16.xpose.msra.mxu0 %v1094
        %1098 = vmatprep.subr.bf16.mxu0 0
        %1099 = vmatpush1.bf16.xpose.msra.mxu0 0
        %1100 = vmatprep.subr.bf16.mxu0 0
        %1101 = vmatpush1.bf16.xpose.msra.mxu0 0
        %1102 = vmatprep.subr.bf16.mxu0 0
        %1103 = vmatpush1.bf16.xpose.msra.mxu0 0
        %1104 = vmatprep.subr.bf16.mxu0 0
        %1105 = vmatpush1.bf16.xpose.msra.mxu0 0
        %1106 = vmatprep.subr.bf16.mxu0 0
        %1107 = vmatpush1.bf16.xpose.msra.mxu0 0
        %1108 = vmatprep.subr.bf16.mxu0 0
        %1109 = vmatpush1.bf16.xpose.msra.mxu0 0
        %1110 = vmatprep.subr.bf16.mxu0 0
        %1111 = vmatpush1.bf16.xpose.msra.mxu0 0
        %1112 = vmatprep.subr.bf16.mxu0 0
        %1113 = vmatpush1.bf16.xpose.msra.mxu0 0
        %1114 = vmatprep.subr.bf16.mxu0 0
        %1115 = vmatpush1.bf16.xpose.msra.mxu0 0
        %1116 = vmatprep.subr.bf16.mxu0 0
        %1117 = vmatpush1.bf16.xpose.msra.mxu0 0
        %1118 = vmatprep.subr.bf16.mxu0 0
        %1119 = vmatpush1.bf16.xpose.msra.mxu0 0
        %1120 = vmatprep.subr.bf16.mxu0 0
        %1121 = vmatpush1.bf16.xpose.msra.mxu0 0
        %1122 = vmatprep.subr.bf16.mxu0 0
        %1123 = vmatpush1.bf16.xpose.msra.mxu0 0
        %1124 = vmatprep.subr.bf16.mxu0 0
        %1125 = vmatpush1.bf16.xpose.msra.mxu0 0
        %1126 = vmatprep.subr.bf16.mxu0 0
        %1127 = vmatpush1.bf16.xpose.msra.mxu0 0
        %1128 = vmatprep.mubr.bf16.mxu0 0
        %1129 = vmatmul.mubr.bf16.gmra.mrb[0].mxu0 %v1091
        %v1130 = vpop.f32.mrb[0].mxu0
        %v1131 = vadd.f32 0.0, %v1130
        %v1132 = vpop.f32.mrb[0].mxu0
        %v1133 = vpop.f32.mrb[0].mxu0
        %v1134 = vpop.f32.mrb[0].mxu0
        %1135 = vdwg.mxu0
        %v1136 = vsel %vm820, %v1131, -inf
        %1137 = vmax.xlane.f32.xlu0 %v1136
        %v1138 = vpop.xlane.xlu0 %1137
        %v1139 = vsub.f32 %v1131, %v1138
        %v1140 = vmul.f32 %v1139, 1.442695
        %v1141 = vpow.pop %v1140
        %v1142 = vsel %vm820, %v1141, 0.0
        %1143 = vadd.xlane.f32.xlu0 %v1142
        %v1144 = vpop.xlane.xlu0 %1143
        %v1145 = vpack.c.bf16 %v1141, %v1141
        %v1147 = vsel %vm820, %v1145, 0
        %1149 = vmatprep.subr.bf16.mxu0 0
        %1150 = vmatpush1.bf16.msra.mxu0 %v1087
        %1151 = vmatprep.subr.bf16.mxu0 0
        %1152 = vmatpush1.bf16.msra.mxu0 0
        %1153 = vmatprep.subr.bf16.mxu0 0
        %1154 = vmatpush1.bf16.msra.mxu0 0
        %1155 = vmatprep.subr.bf16.mxu0 0
        %1156 = vmatpush1.bf16.msra.mxu0 0
        %1157 = vmatprep.subr.bf16.mxu0 0
        %1158 = vmatpush1.bf16.msra.mxu0 0
        %1159 = vmatprep.subr.bf16.mxu0 0
        %1160 = vmatpush1.bf16.msra.mxu0 0
        %1161 = vmatprep.subr.bf16.mxu0 0
        %1162 = vmatpush1.bf16.msra.mxu0 0
        %1163 = vmatprep.subr.bf16.mxu0 0
        %1164 = vmatpush1.bf16.msra.mxu0 0
        %1165 = vmatprep.subr.bf16.mxu0 0
        %1166 = vmatpush1.bf16.msra.mxu0 0
        %1167 = vmatprep.subr.bf16.mxu0 0
        %1168 = vmatpush1.bf16.msra.mxu0 0
        %1169 = vmatprep.subr.bf16.mxu0 0
        %1170 = vmatpush1.bf16.msra.mxu0 0
        %1171 = vmatprep.subr.bf16.mxu0 0
        %1172 = vmatpush1.bf16.msra.mxu0 0
        %1173 = vmatprep.subr.bf16.mxu0 0
        %1174 = vmatpush1.bf16.msra.mxu0 0
        %1175 = vmatprep.subr.bf16.mxu0 0
        %1176 = vmatpush1.bf16.msra.mxu0 0
        %1177 = vmatprep.subr.bf16.mxu0 0
        %1178 = vmatpush1.bf16.msra.mxu0 0
        %1179 = vmatprep.subr.bf16.mxu0 0
        %1180 = vmatpush1.bf16.msra.mxu0 0
        %1181 = vmatprep.mubr.bf16.mxu0 0
        %1182 = vmatmul.mubr.bf16.gmra.mrb[0].mxu0 %v1147
        %v1183 = vpop.f32.mrb[0].mxu0
        %v1184 = vadd.f32 0.0, %v1183
        %v1185 = vpop.f32.mrb[0].mxu0
        %v1186 = vpop.f32.mrb[0].mxu0
        %v1187 = vpop.f32.mrb[0].mxu0
        %1188 = vdwg.mxu0
        %v1189 = vrcp.pop %v1144
        %v1190 = vmul.f32 %v1184, %v1189
        %v1191 = vpack.c.bf16 %v1190, %v1190
        %s1192 = scalar_lea.vmem %s6, 8
        %v1193 = vld [vmem:[%s1192] sm:$0xf]
        %v1195 = vsel %vm773, %v1191, 0
        %v1198 = vsel %vm881, %v1193, 0
        %1200 = vmatprep.subr.bf16.mxu0 0
        %1201 = vmatpush1.bf16.msra.mxu0 %v1198
        %1202 = vmatprep.subr.bf16.mxu0 0
        %1203 = vmatpush1.bf16.msra.mxu0 0
        %1204 = vmatprep.subr.bf16.mxu0 0
        %1205 = vmatpush1.bf16.msra.mxu0 0
        %1206 = vmatprep.subr.bf16.mxu0 0
        %1207 = vmatpush1.bf16.msra.mxu0 0
        %1208 = vmatprep.subr.bf16.mxu0 0
        %1209 = vmatpush1.bf16.msra.mxu0 0
        %1210 = vmatprep.subr.bf16.mxu0 0
        %1211 = vmatpush1.bf16.msra.mxu0 0
        %1212 = vmatprep.subr.bf16.mxu0 0
        %1213 = vmatpush1.bf16.msra.mxu0 0
        %1214 = vmatprep.subr.bf16.mxu0 0
        %1215 = vmatpush1.bf16.msra.mxu0 0
        %1216 = vmatprep.subr.bf16.mxu0 0
        %1217 = vmatpush1.bf16.msra.mxu0 0
        %1218 = vmatprep.subr.bf16.mxu0 0
        %1219 = vmatpush1.bf16.msra.mxu0 0
        %1220 = vmatprep.subr.bf16.mxu0 0
        %1221 = vmatpush1.bf16.msra.mxu0 0
        %1222 = vmatprep.subr.bf16.mxu0 0
        %1223 = vmatpush1.bf16.msra.mxu0 0
        %1224 = vmatprep.subr.bf16.mxu0 0
        %1225 = vmatpush1.bf16.msra.mxu0 0
        %1226 = vmatprep.subr.bf16.mxu0 0
        %1227 = vmatpush1.bf16.msra.mxu0 0
        %1228 = vmatprep.subr.bf16.mxu0 0
        %1229 = vmatpush1.bf16.msra.mxu0 0
        %1230 = vmatprep.subr.bf16.mxu0 0
        %1231 = vmatpush1.bf16.msra.mxu0 0
        %1232 = vmatprep.mubr.bf16.mxu0 0
        %1233 = vmatmul.mubr.bf16.gmra.mrb[0].mxu0 %v1195
        %v1234 = vpop.f32.mrb[0].mxu0
        %v1235 = vadd.f32 0.0, %v1234
        %v1236 = vpop.f32.mrb[0].mxu0
        %v1237 = vpop.f32.mrb[0].mxu0
        %v1238 = vpop.f32.mrb[0].mxu0
        %1239 = vdwg.mxu0
        %v1240 = vadd.f32 %v1083, %v1235
        %s1241 = scalar_lea.vmem [#allocation2], 24
        %v1242 = vld [vmem:[%s1241] sm:$0xff]
        %s1243 = scalar_lea.vmem [#allocation3], 24
        %v1244 = vld [vmem:[%s1243] sm:$0xff]
        %1245 = vrot.lane.b32.xlu0 %v770, 104
        %v1246 = vpop.permute.xlu0 %1245
        %v1248 = vsel %vm773, %v1246, 0
        %v1251 = vsel %vm773, %v1242, 0
        %1253 = vmatprep.subr.bf16.mxu0 0
        %1254 = vmatpush1.bf16.xpose.msra.mxu0 %v1251
        %1255 = vmatprep.subr.bf16.mxu0 0
        %1256 = vmatpush1.bf16.xpose.msra.mxu0 0
        %1257 = vmatprep.subr.bf16.mxu0 0
        %1258 = vmatpush1.bf16.xpose.msra.mxu0 0
        %1259 = vmatprep.subr.bf16.mxu0 0
        %1260 = vmatpush1.bf16.xpose.msra.mxu0 0
        %1261 = vmatprep.subr.bf16.mxu0 0
        %1262 = vmatpush1.bf16.xpose.msra.mxu0 0
        %1263 = vmatprep.subr.bf16.mxu0 0
        %1264 = vmatpush1.bf16.xpose.msra.mxu0 0
        %1265 = vmatprep.subr.bf16.mxu0 0
        %1266 = vmatpush1.bf16.xpose.msra.mxu0 0
        %1267 = vmatprep.subr.bf16.mxu0 0
        %1268 = vmatpush1.bf16.xpose.msra.mxu0 0
        %1269 = vmatprep.subr.bf16.mxu0 0
        %1270 = vmatpush1.bf16.xpose.msra.mxu0 0
        %1271 = vmatprep.subr.bf16.mxu0 0
        %1272 = vmatpush1.bf16.xpose.msra.mxu0 0
        %1273 = vmatprep.subr.bf16.mxu0 0
        %1274 = vmatpush1.bf16.xpose.msra.mxu0 0
        %1275 = vmatprep.subr.bf16.mxu0 0
        %1276 = vmatpush1.bf16.xpose.msra.mxu0 0
        %1277 = vmatprep.subr.bf16.mxu0 0
        %1278 = vmatpush1.bf16.xpose.msra.mxu0 0
        %1279 = vmatprep.subr.bf16.mxu0 0
        %1280 = vmatpush1.bf16.xpose.msra.mxu0 0
        %1281 = vmatprep.subr.bf16.mxu0 0
        %1282 = vmatpush1.bf16.xpose.msra.mxu0 0
        %1283 = vmatprep.subr.bf16.mxu0 0
        %1284 = vmatpush1.bf16.xpose.msra.mxu0 0
        %1285 = vmatprep.mubr.bf16.mxu0 0
        %1286 = vmatmul.mubr.bf16.gmra.mrb[0].mxu0 %v1248
        %v1287 = vpop.f32.mrb[0].mxu0
        %v1288 = vadd.f32 0.0, %v1287
        %v1289 = vpop.f32.mrb[0].mxu0
        %v1290 = vpop.f32.mrb[0].mxu0
        %v1291 = vpop.f32.mrb[0].mxu0
        %1292 = vdwg.mxu0
        %v1293 = vsel %vm820, %v1288, -inf
        %1294 = vmax.xlane.f32.xlu0 %v1293
        %v1295 = vpop.xlane.xlu0 %1294
        %v1296 = vsub.f32 %v1288, %v1295
        %v1297 = vmul.f32 %v1296, 1.442695
        %v1298 = vpow.pop %v1297
        %v1299 = vsel %vm820, %v1298, 0.0
        %1300 = vadd.xlane.f32.xlu0 %v1299
        %v1301 = vpop.xlane.xlu0 %1300
        %v1302 = vpack.c.bf16 %v1298, %v1298
        %v1304 = vsel %vm820, %v1302, 0
        %1306 = vmatprep.subr.bf16.mxu0 0
        %1307 = vmatpush1.bf16.msra.mxu0 %v1244
        %1308 = vmatprep.subr.bf16.mxu0 0
        %1309 = vmatpush1.bf16.msra.mxu0 0
        %1310 = vmatprep.subr.bf16.mxu0 0
        %1311 = vmatpush1.bf16.msra.mxu0 0
        %1312 = vmatprep.subr.bf16.mxu0 0
        %1313 = vmatpush1.bf16.msra.mxu0 0
        %1314 = vmatprep.subr.bf16.mxu0 0
        %1315 = vmatpush1.bf16.msra.mxu0 0
        %1316 = vmatprep.subr.bf16.mxu0 0
        %1317 = vmatpush1.bf16.msra.mxu0 0
        %1318 = vmatprep.subr.bf16.mxu0 0
        %1319 = vmatpush1.bf16.msra.mxu0 0
        %1320 = vmatprep.subr.bf16.mxu0 0
        %1321 = vmatpush1.bf16.msra.mxu0 0
        %1322 = vmatprep.subr.bf16.mxu0 0
        %1323 = vmatpush1.bf16.msra.mxu0 0
        %1324 = vmatprep.subr.bf16.mxu0 0
        %1325 = vmatpush1.bf16.msra.mxu0 0
        %1326 = vmatprep.subr.bf16.mxu0 0
        %1327 = vmatpush1.bf16.msra.mxu0 0
        %1328 = vmatprep.subr.bf16.mxu0 0
        %1329 = vmatpush1.bf16.msra.mxu0 0
        %1330 = vmatprep.subr.bf16.mxu0 0
        %1331 = vmatpush1.bf16.msra.mxu0 0
        %1332 = vmatprep.subr.bf16.mxu0 0
        %1333 = vmatpush1.bf16.msra.mxu0 0
        %1334 = vmatprep.subr.bf16.mxu0 0
        %1335 = vmatpush1.bf16.msra.mxu0 0
        %1336 = vmatprep.subr.bf16.mxu0 0
        %1337 = vmatpush1.bf16.msra.mxu0 0
        %1338 = vmatprep.mubr.bf16.mxu0 0
        %1339 = vmatmul.mubr.bf16.gmra.mrb[0].mxu0 %v1304
        %v1340 = vpop.f32.mrb[0].mxu0
        %v1341 = vadd.f32 0.0, %v1340
        %v1342 = vpop.f32.mrb[0].mxu0
        %v1343 = vpop.f32.mrb[0].mxu0
        %v1344 = vpop.f32.mrb[0].mxu0
        %1345 = vdwg.mxu0
        %v1346 = vrcp.pop %v1301
        %v1347 = vmul.f32 %v1341, %v1346
        %v1348 = vpack.c.bf16 %v1347, %v1347
        %s1349 = scalar_lea.vmem %s6, 12
        %v1350 = vld [vmem:[%s1349] sm:$0xf]
        %v1352 = vsel %vm773, %v1348, 0
        %v1355 = vsel %vm881, %v1350, 0
        %1357 = vmatprep.subr.bf16.mxu0 0
        %1358 = vmatpush1.bf16.msra.mxu0 %v1355
        %1359 = vmatprep.subr.bf16.mxu0 0
        %1360 = vmatpush1.bf16.msra.mxu0 0
        %1361 = vmatprep.subr.bf16.mxu0 0
        %1362 = vmatpush1.bf16.msra.mxu0 0
        %1363 = vmatprep.subr.bf16.mxu0 0
        %1364 = vmatpush1.bf16.msra.mxu0 0
        %1365 = vmatprep.subr.bf16.mxu0 0
        %1366 = vmatpush1.bf16.msra.mxu0 0
        %1367 = vmatprep.subr.bf16.mxu0 0
        %1368 = vmatpush1.bf16.msra.mxu0 0
        %1369 = vmatprep.subr.bf16.mxu0 0
        %1370 = vmatpush1.bf16.msra.mxu0 0
        %1371 = vmatprep.subr.bf16.mxu0 0
        %1372 = vmatpush1.bf16.msra.mxu0 0
        %1373 = vmatprep.subr.bf16.mxu0 0
        %1374 = vmatpush1.bf16.msra.mxu0 0
        %1375 = vmatprep.subr.bf16.mxu0 0
        %1376 = vmatpush1.bf16.msra.mxu0 0
        %1377 = vmatprep.subr.bf16.mxu0 0
        %1378 = vmatpush1.bf16.msra.mxu0 0
        %1379 = vmatprep.subr.bf16.mxu0 0
        %1380 = vmatpush1.bf16.msra.mxu0 0
        %1381 = vmatprep.subr.bf16.mxu0 0
        %1382 = vmatpush1.bf16.msra.mxu0 0
        %1383 = vmatprep.subr.bf16.mxu0 0
        %1384 = vmatpush1.bf16.msra.mxu0 0
        %1385 = vmatprep.subr.bf16.mxu0 0
        %1386 = vmatpush1.bf16.msra.mxu0 0
        %1387 = vmatprep.subr.bf16.mxu0 0
        %1388 = vmatpush1.bf16.msra.mxu0 0
        %1389 = vmatprep.mubr.bf16.mxu0 0
        %1390 = vmatmul.mubr.bf16.gmra.mrb[0].mxu0 %v1352
        %v1391 = vpop.f32.mrb[0].mxu0
        %v1392 = vadd.f32 0.0, %v1391
        %v1393 = vpop.f32.mrb[0].mxu0
        %v1394 = vpop.f32.mrb[0].mxu0
        %v1395 = vpop.f32.mrb[0].mxu0
        %1396 = vdwg.mxu0
        %v1397 = vadd.f32 %v1240, %v1392
        %1398 = vadd.xlane.f32.xlu0 %v1397
        %v1399 = vpop.xlane.xlu0 %1398
        %v1400 = vmul.f32 %v1399, 0.03125
        %v1401 = vmul.f32 %v1397, %v1397
        %1402 = vadd.xlane.f32.xlu0 %v1401
        %v1403 = vpop.xlane.xlu0 %1402
        %v1404 = vmul.f32 %v1403, 0.03125
        %v1405 = vmul.f32 %v1400, %v1400
        %v1406 = vsub.f32 %v1404, %v1405
        %v1407 = vsub.f32 %v1397, %v1400
        %v1408 = vadd.f32 %v1406, 1e-06
        %v1409 = vrsqrt.pop %v1408
        %v1410 = vmul.f32 %v1407, %v1409
        %v1411 = vld [vmem:[%s7] sm:$0x1]
        %v1413 = vlaneseq
        %v1414 = vshrl.u32 %v1413, 7
        %v1415 = vsub.s32 0, %v1414
        %v1416 = vrot.slane %v1411, %v1415
        %v1418 = vmul.f32 %v1410, %v1416
        %v1419 = vld [vmem:[%s8] sm:$0x1]
        %v1421 = vlaneseq
        %v1422 = vshrl.u32 %v1421, 7
        %v1423 = vsub.s32 0, %v1422
        %v1424 = vrot.slane %v1419, %v1423
        %v1426 = vadd.f32 %v1418, %v1424
        %1427 = vst [vmem:[%s377] sm:$0xff] %v1426
        %s1428 = sand.u32 %s251, 1
        %s1429 = scalar_lea.sflag [#allocation5], %s1428
        %s1430 = sand.u32 %s251, 1
        %s1431 = smul.addr %s1430, 8
        %s1432 = scalar_lea.vmem [#allocation4], %s1431
        // Predicated region
        $region61: #{tpu_custom_call.1} parent=55 // pred_check
          %p1433 = pneg %p261
        $region62: #{tpu_custom_call.1} parent=55 // pred_check_branch
          %1435 = sbr.rel (%p1433) target = $region64
        $region63: #{tpu_custom_call.1} parent=55 // pred_region
          %s1437 = ssub.s32 128, 128
          %1438 = vsyncadd %s1429, %s1437
          %s1439 = smul.addr %s27, 2
          %s1440 = sadd.s32 %s28, %s1439
          %s1441 = smul.addr %s1440, 128
          %s1442 = scalar_lea.hbm %s9, %s1441
          %s1444 = sshll.u32 %s1432, 4
          %s1445 = int_to_ptr.vmem [resolvable:$true] %s1444
          %1447 = dma.vmem_to_hbm [thread:$0]  %s1445, 128, %s1442, %s1429
        $region64: #{tpu_custom_call.1} parent=55 // pred_fallthru
          _
      $region56: #{tpu_custom_call.1} parent=5 // pred_fallthru
        _
      %p1448 = scmp.le.s32.totalorder 2, %s18
      // Predicated region
      $region65: #{tpu_custom_call.1} parent=5 // pred_check
        %p1449 = pneg %p1448
      $region66: #{tpu_custom_call.1} parent=5 // pred_check_branch
        %1451 = sbr.rel (%p1449) target = $region68
      $region67: #{tpu_custom_call.1} parent=5 // pred_region
        %s1452 = ssub.s32 %s18, 2
        // Predicated region
        $region69: #{tpu_custom_call.1} parent=67 // pred_check
          %p1453 = pneg %p267
        $region70: #{tpu_custom_call.1} parent=67 // pred_check_branch
          %1455 = sbr.rel (%p1453) target = $region72
        $region71: #{tpu_custom_call.1} parent=67 // pred_region
          %s1456 = sand.u32 %s252, 1
          %s1457 = scalar_lea.sflag [#allocation5], %s1456
          %s1458 = sand.u32 %s252, 1
          %s1459 = smul.addr %s1458, 8
          %s1460 = scalar_lea.vmem [#allocation4], %s1459
          %1461 = dma.done %s1457, 128
        $region72: #{tpu_custom_call.1} parent=67 // pred_fallthru
          _
      $region68: #{tpu_custom_call.1} parent=5 // pred_fallthru
        _
    $region6: #{tpu_custom_call.1} parent=1 // loop_footer
      %s22 = sadd.s32 1, %s18
    $region7: #{tpu_custom_call.1} parent=1 // loop_footer_branch
      %17 = sbr.rel target = $region3
    $region8: #{tpu_custom_call.1} parent=1 // loop_exit
      _
    %1462 = vsyncpa [#allocation5], 1
    %s1463 = scalar_lea.sflag [#allocation5], 1
    %1464 = vsyncpa %s1463, 1

</llo_original>
